<compile_context>
chip_gen: v7x
topology: tpu7x:2x2x1
jax: 0.10.0
libtpu: 0.0.40
codegen_flags: <defaults>
</compile_context>

<pallas_src>
import functools

import jax
import jax.numpy as jnp
from jax import lax
from jax.experimental import pallas as pl
from jax.experimental.pallas import tpu as pltpu


def _t_ham_layer_kernel(x_ref, khat_ref, b_ref, minv_ref, mh_ref,
                        xo_ref, z_ref, *, dim3):
    """One residual layer on one sample tile.

    Kernel-side layout (dim3-major, hat domain for the state):
      x_ref    : (dim3, f, TN)     VMEM   initial hat(x) tile (read at layer 0)
      khat_ref : (1, dim3, w, f)   VMEM   hat(K) of the current layer
      b_ref    : (1, dim3, w, 1)   VMEM   bias of the current layer
      minv_ref : (dim3, dim3)      SMEM   M^{-1}
      mh_ref   : (dim3, dim3)      SMEM   h * M   (step size folded in)
      xo_ref   : (dim3, f, TN)     VMEM   hat(x) state, resident across layers
      z_ref    : (dim3, f, TN)     VMEM   hat(z) state (scratch)
    """
    d = dim3
    layer = pl.program_id(1)

    @pl.when(layer == 0)
    def _init():
        xo_ref[...] = x_ref[...]
        z_ref[...] = jnp.zeros_like(z_ref)

    # Hoisted SMEM coefficient reads, reused by both half-steps.
    minv = [[minv_ref[r, c] for c in range(d)] for r in range(d)]
    mh = [[mh_ref[r, c] for c in range(d)] for r in range(d)]

    k_hat = [khat_ref[0, k] for k in range(d)]   # (w, f) faces, hat domain
    bias = [b_ref[0, k] for k in range(d)]       # (w, 1)

    def mode3(coef, faces):
        # out[r] = sum_c coef[r][c] * faces[c]
        out = []
        for r in range(d):
            acc = coef[r][0] * faces[0]
            for c in range(1, d):
                acc = acc + coef[r][c] * faces[c]
            out.append(acc)
        return out

    def half_step(state):
        # state: d hat-domain (f, TN) faces.  Returns h * hat(K^T *_M sigma(K *_M s + b)).
        u_hat = [jnp.dot(k_hat[k], state[k], preferred_element_type=jnp.float32)
                 for k in range(d)]                          # (w, TN), hat domain
        u = mode3(minv, u_hat)                               # original domain
        a = [jnp.tanh(u[k] + bias[k]) for k in range(d)]     # bias + activation
        ah = mode3(mh, a)                                    # hat domain, scaled by h
        # hat(K)^T @ ah  (contract over width; no transposed weight copy needed)
        return [lax.dot_general(k_hat[k], ah[k],
                                dimension_numbers=(((0,), (0,)), ((), ())),
                                preferred_element_type=jnp.float32)
                for k in range(d)]                           # (f, TN)

    x_faces = [xo_ref[k] for k in range(d)]

    dz = half_step(x_faces)                                  # z <- z - h K^T σ(Kx+b)
    z_faces = [z_ref[k] - dz[k] for k in range(d)]
    for k in range(d):
        z_ref[k] = z_faces[k]

    dx = half_step(z_faces)                                  # x <- x + h K^T σ(Kz+b)
    for k in range(d):
        xo_ref[k] = x_faces[k] + dx[k]


def t_hamiltonian_resnet(x, K, b, M, *, depth, h, block_n=128):
    """x: (f, n, dim3); K: (depth, w, f, dim3); b: (depth, w, 1, dim3); M: (dim3, dim3).
    Returns x with the same shape as the input."""
    f, n, d = x.shape
    w = K.shape[1]
    assert K.shape[0] == depth and b.shape[0] == depth

    Minv = jnp.linalg.inv(M).astype(jnp.float32)
    Mh = (h * M).astype(jnp.float32)

    tn = block_n
    n_tiles = -(-n // tn)
    n_pad = n_tiles * tn
    if n_pad != n:
        x = jnp.pad(x, ((0, 0), (0, n_pad - n), (0, 0)))

    # Host-side plumbing: hat-domain, dim3-major layouts (input-invariant work
    # is done once here instead of per grid step inside the kernel).
    x_hat = jnp.einsum('kl,fnl->kfn', M, x).astype(jnp.float32)      # (d, f, n_pad)
    K_hat = jnp.einsum('kl,zwfl->zkwf', M, K).astype(jnp.float32)    # (depth, d, w, f)
    b_dev = jnp.transpose(b, (0, 3, 1, 2)).astype(jnp.float32)       # (depth, d, w, 1)

    kern = functools.partial(_t_ham_layer_kernel, dim3=d)
    xo_hat = pl.pallas_call(
        kern,
        out_shape=jax.ShapeDtypeStruct((d, f, n_pad), jnp.float32),
        grid_spec=pltpu.PrefetchScalarGridSpec(
            num_scalar_prefetch=0,
            grid=(n_tiles, depth),
            in_specs=[
                pl.BlockSpec((d, f, tn), lambda i, l: (0, 0, i)),       # hat(x) tile
                pl.BlockSpec((1, d, w, f), lambda i, l: (l, 0, 0, 0)),  # hat(K), per layer
                pl.BlockSpec((1, d, w, 1), lambda i, l: (l, 0, 0, 0)),  # bias, per layer
                pl.BlockSpec(memory_space=pltpu.MemorySpace.SMEM),      # M^{-1}
                pl.BlockSpec(memory_space=pltpu.MemorySpace.SMEM),      # h*M
            ],
            out_specs=pl.BlockSpec((d, f, tn), lambda i, l: (0, 0, i)),  # resident over l
            scratch_shapes=[pltpu.VMEM((d, f, tn), jnp.float32)],        # hat(z) state
        ),
        compiler_params=pltpu.CompilerParams(
            dimension_semantics=("parallel", "arbitrary"),
            vmem_limit_bytes=32 * 1024 * 1024,
        ),
    )(x_hat, K_hat, b_dev, Minv, Mh)

    out = jnp.einsum('kl,lfn->fnk', Minv, xo_hat)                    # back to original domain
    return out[:, :n, :].astype(x.dtype)


def _reference(x, K, b, M, *, depth, h):
    """Pure-JAX reference of the same forward pass (tnn layout)."""
    Minv = jnp.linalg.inv(M)

    def mode3(T, A):                     # A: (..., dim3)
        return jnp.einsum('kl,...l->...k', T, A)

    def tprod(A, B):                     # A: (w, f, d), B: (f, n, d) -> (w, n, d)
        Ch = jnp.einsum('wfk,fnk->wnk', mode3(M, A), mode3(M, B))
        return mode3(Minv, Ch)

    def tprod_T(A, B):                   # A^T *_M B: A (w, f, d), B (w, n, d) -> (f, n, d)
        Ch = jnp.einsum('wfk,wnk->fnk', mode3(M, A), mode3(M, B))
        return mode3(Minv, Ch)

    z = jnp.zeros_like(x)
    for layer in range(depth):
        Kl, bl = K[layer], b[layer]
        z = z - h * tprod_T(Kl, jnp.tanh(tprod(Kl, x) + bl))
        x = x + h * tprod_T(Kl, jnp.tanh(tprod(Kl, z) + bl))
    return x


if __name__ == "__main__":
    in_features, width, dim3 = 8, 16, 4
    n_samples, depth, h = 256, 3, 0.1

    key = jax.random.PRNGKey(0)
    kx, kk, kb, km = jax.random.split(key, 4)

    x = jax.random.normal(kx, (in_features, n_samples, dim3), dtype=jnp.float32)
    K = jax.random.normal(kk, (depth, width, in_features, dim3), dtype=jnp.float32)
    K = K / jnp.sqrt(jnp.float32(in_features * dim3))
    b = 0.1 * jax.random.normal(kb, (depth, width, 1, dim3), dtype=jnp.float32)
    # Orthogonal mode-3 transform M (deterministic via QR).
    M, _ = jnp.linalg.qr(jax.random.normal(km, (dim3, dim3), dtype=jnp.float32))

    out = jax.block_until_ready(t_hamiltonian_resnet(x, K, b, M, depth=depth, h=h))
    ref = jax.block_until_ready(_reference(x, K, b, M, depth=depth, h=h))

    assert out.shape == x.shape and out.dtype == jnp.float32
    err = jnp.max(jnp.abs(out - ref))
    assert jnp.allclose(out, ref, rtol=1e-4, atol=1e-4), f"max abs err = {err}"
    print("KERNEL_OK")
</pallas_src>

<mosaic_0001>
module attributes {stable_mosaic.version = 11 : i64} {
  func.func @_t_ham_layer_kernel(%arg0: i32, %arg1: i32, %arg2: memref<4x8x128xf32, #tpu.memory_space<vmem>>, %arg3: memref<1x4x16x8xf32, #tpu.memory_space<vmem>>, %arg4: memref<1x4x16x1xf32, #tpu.memory_space<vmem>>, %arg5: memref<4x4xf32, #tpu.memory_space<smem>>, %arg6: memref<4x4xf32, #tpu.memory_space<smem>>, %arg7: memref<4x8x128xf32, #tpu.memory_space<vmem>>, %arg8: memref<4x8x128xf32, #tpu.memory_space<vmem>>) attributes {dimension_semantics = [#tpu.dimension_semantics<parallel>, #tpu.dimension_semantics<arbitrary>], iteration_bounds = array<i64: 2, 3>, scalar_prefetch = 0 : i64, scratch_operands = 1 : i64, tpu.core_type = #tpu.core_type<tc>, window_params = [{transform_indices = @transform_0, window_bounds = array<i64: 4, 8, 128>}, {transform_indices = @transform_1, window_bounds = array<i64: 1, 4, 16, 8>}, {transform_indices = @transform_2, window_bounds = array<i64: 1, 4, 16, 1>}, {transform_indices = @transform_3, window_bounds = array<i64: 4, 4>}, {transform_indices = @transform_4, window_bounds = array<i64: 4, 4>}, {transform_indices = @transform_5, window_bounds = array<i64: 4, 8, 128>}]} {
    %c0_i32 = arith.constant 0 : i32
    %0 = arith.cmpi eq, %arg1, %c0_i32 : i32
    %1 = arith.extui %0 : i1 to i32
    %c0_i32_0 = arith.constant 0 : i32
    %2 = arith.cmpi ne, %1, %c0_i32_0 : i32
    scf.if %2 {
      %c0_156 = arith.constant 0 : index
      %c0_157 = arith.constant 0 : index
      %c0_158 = arith.constant 0 : index
      %315 = vector.load %arg2[%c0_156, %c0_157, %c0_158] : memref<4x8x128xf32, #tpu.memory_space<vmem>>, vector<4x8x128xf32>
      %c0_159 = arith.constant 0 : index
      %c0_160 = arith.constant 0 : index
      %c0_161 = arith.constant 0 : index
      %316 = vector.load %arg7[%c0_159, %c0_160, %c0_161] : memref<4x8x128xf32, #tpu.memory_space<vmem>>, vector<4x8x128xf32>
      tpu.vector_store %arg7[%c0_159, %c0_160, %c0_161], %315 {strides = array<i32>} : memref<4x8x128xf32, #tpu.memory_space<vmem>>, vector<4x8x128xf32>,
      %cst_162 = arith.constant 0.000000e+00 : f32
      %317 = vector.broadcast %cst_162 : f32 to vector<4x8x128xf32>
      %c0_163 = arith.constant 0 : index
      %c0_164 = arith.constant 0 : index
      %c0_165 = arith.constant 0 : index
      %318 = vector.load %arg8[%c0_163, %c0_164, %c0_165] : memref<4x8x128xf32, #tpu.memory_space<vmem>>, vector<4x8x128xf32>
      tpu.vector_store %arg8[%c0_163, %c0_164, %c0_165], %317 {strides = array<i32>} : memref<4x8x128xf32, #tpu.memory_space<vmem>>, vector<4x8x128xf32>,
    } else {
    }
    %c0 = arith.constant 0 : index
    %c0_1 = arith.constant 0 : index
    %3 = memref.load %arg5[%c0, %c0_1] : memref<4x4xf32, #tpu.memory_space<smem>>
    %c0_2 = arith.constant 0 : index
    %c1 = arith.constant 1 : index
    %4 = memref.load %arg5[%c0_2, %c1] : memref<4x4xf32, #tpu.memory_space<smem>>
    %c0_3 = arith.constant 0 : index
    %c2 = arith.constant 2 : index
    %5 = memref.load %arg5[%c0_3, %c2] : memref<4x4xf32, #tpu.memory_space<smem>>
    %c0_4 = arith.constant 0 : index
    %c3 = arith.constant 3 : index
    %6 = memref.load %arg5[%c0_4, %c3] : memref<4x4xf32, #tpu.memory_space<smem>>
    %c1_5 = arith.constant 1 : index
    %c0_6 = arith.constant 0 : index
    %7 = memref.load %arg5[%c1_5, %c0_6] : memref<4x4xf32, #tpu.memory_space<smem>>
    %c1_7 = arith.constant 1 : index
    %c1_8 = arith.constant 1 : index
    %8 = memref.load %arg5[%c1_7, %c1_8] : memref<4x4xf32, #tpu.memory_space<smem>>
    %c1_9 = arith.constant 1 : index
    %c2_10 = arith.constant 2 : index
    %9 = memref.load %arg5[%c1_9, %c2_10] : memref<4x4xf32, #tpu.memory_space<smem>>
    %c1_11 = arith.constant 1 : index
    %c3_12 = arith.constant 3 : index
    %10 = memref.load %arg5[%c1_11, %c3_12] : memref<4x4xf32, #tpu.memory_space<smem>>
    %c2_13 = arith.constant 2 : index
    %c0_14 = arith.constant 0 : index
    %11 = memref.load %arg5[%c2_13, %c0_14] : memref<4x4xf32, #tpu.memory_space<smem>>
    %c2_15 = arith.constant 2 : index
    %c1_16 = arith.constant 1 : index
    %12 = memref.load %arg5[%c2_15, %c1_16] : memref<4x4xf32, #tpu.memory_space<smem>>
    %c2_17 = arith.constant 2 : index
    %c2_18 = arith.constant 2 : index
    %13 = memref.load %arg5[%c2_17, %c2_18] : memref<4x4xf32, #tpu.memory_space<smem>>
    %c2_19 = arith.constant 2 : index
    %c3_20 = arith.constant 3 : index
    %14 = memref.load %arg5[%c2_19, %c3_20] : memref<4x4xf32, #tpu.memory_space<smem>>
    %c3_21 = arith.constant 3 : index
    %c0_22 = arith.constant 0 : index
    %15 = memref.load %arg5[%c3_21, %c0_22] : memref<4x4xf32, #tpu.memory_space<smem>>
    %c3_23 = arith.constant 3 : index
    %c1_24 = arith.constant 1 : index
    %16 = memref.load %arg5[%c3_23, %c1_24] : memref<4x4xf32, #tpu.memory_space<smem>>
    %c3_25 = arith.constant 3 : index
    %c2_26 = arith.constant 2 : index
    %17 = memref.load %arg5[%c3_25, %c2_26] : memref<4x4xf32, #tpu.memory_space<smem>>
    %c3_27 = arith.constant 3 : index
    %c3_28 = arith.constant 3 : index
    %18 = memref.load %arg5[%c3_27, %c3_28] : memref<4x4xf32, #tpu.memory_space<smem>>
    %c0_29 = arith.constant 0 : index
    %c0_30 = arith.constant 0 : index
    %19 = memref.load %arg6[%c0_29, %c0_30] : memref<4x4xf32, #tpu.memory_space<smem>>
    %c0_31 = arith.constant 0 : index
    %c1_32 = arith.constant 1 : index
    %20 = memref.load %arg6[%c0_31, %c1_32] : memref<4x4xf32, #tpu.memory_space<smem>>
    %c0_33 = arith.constant 0 : index
    %c2_34 = arith.constant 2 : index
    %21 = memref.load %arg6[%c0_33, %c2_34] : memref<4x4xf32, #tpu.memory_space<smem>>
    %c0_35 = arith.constant 0 : index
    %c3_36 = arith.constant 3 : index
    %22 = memref.load %arg6[%c0_35, %c3_36] : memref<4x4xf32, #tpu.memory_space<smem>>
    %c1_37 = arith.constant 1 : index
    %c0_38 = arith.constant 0 : index
    %23 = memref.load %arg6[%c1_37, %c0_38] : memref<4x4xf32, #tpu.memory_space<smem>>
    %c1_39 = arith.constant 1 : index
    %c1_40 = arith.constant 1 : index
    %24 = memref.load %arg6[%c1_39, %c1_40] : memref<4x4xf32, #tpu.memory_space<smem>>
    %c1_41 = arith.constant 1 : index
    %c2_42 = arith.constant 2 : index
    %25 = memref.load %arg6[%c1_41, %c2_42] : memref<4x4xf32, #tpu.memory_space<smem>>
    %c1_43 = arith.constant 1 : index
    %c3_44 = arith.constant 3 : index
    %26 = memref.load %arg6[%c1_43, %c3_44] : memref<4x4xf32, #tpu.memory_space<smem>>
    %c2_45 = arith.constant 2 : index
    %c0_46 = arith.constant 0 : index
    %27 = memref.load %arg6[%c2_45, %c0_46] : memref<4x4xf32, #tpu.memory_space<smem>>
    %c2_47 = arith.constant 2 : index
    %c1_48 = arith.constant 1 : index
    %28 = memref.load %arg6[%c2_47, %c1_48] : memref<4x4xf32, #tpu.memory_space<smem>>
    %c2_49 = arith.constant 2 : index
    %c2_50 = arith.constant 2 : index
    %29 = memref.load %arg6[%c2_49, %c2_50] : memref<4x4xf32, #tpu.memory_space<smem>>
    %c2_51 = arith.constant 2 : index
    %c3_52 = arith.constant 3 : index
    %30 = memref.load %arg6[%c2_51, %c3_52] : memref<4x4xf32, #tpu.memory_space<smem>>
    %c3_53 = arith.constant 3 : index
    %c0_54 = arith.constant 0 : index
    %31 = memref.load %arg6[%c3_53, %c0_54] : memref<4x4xf32, #tpu.memory_space<smem>>
    %c3_55 = arith.constant 3 : index
    %c1_56 = arith.constant 1 : index
    %32 = memref.load %arg6[%c3_55, %c1_56] : memref<4x4xf32, #tpu.memory_space<smem>>
    %c3_57 = arith.constant 3 : index
    %c2_58 = arith.constant 2 : index
    %33 = memref.load %arg6[%c3_57, %c2_58] : memref<4x4xf32, #tpu.memory_space<smem>>
    %c3_59 = arith.constant 3 : index
    %c3_60 = arith.constant 3 : index
    %34 = memref.load %arg6[%c3_59, %c3_60] : memref<4x4xf32, #tpu.memory_space<smem>>
    %c0_61 = arith.constant 0 : index
    %c0_62 = arith.constant 0 : index
    %c0_63 = arith.constant 0 : index
    %c0_64 = arith.constant 0 : index
    %35 = vector.load %arg3[%c0_61, %c0_62, %c0_63, %c0_64] : memref<1x4x16x8xf32, #tpu.memory_space<vmem>>, vector<1x1x16x8xf32>
    %36 = vector.shape_cast %35 : vector<1x1x16x8xf32> to vector<16x8xf32>
    %c0_65 = arith.constant 0 : index
    %c1_66 = arith.constant 1 : index
    %c0_67 = arith.constant 0 : index
    %c0_68 = arith.constant 0 : index
    %37 = vector.load %arg3[%c0_65, %c1_66, %c0_67, %c0_68] : memref<1x4x16x8xf32, #tpu.memory_space<vmem>>, vector<1x1x16x8xf32>
    %38 = vector.shape_cast %37 : vector<1x1x16x8xf32> to vector<16x8xf32>
    %c0_69 = arith.constant 0 : index
    %c2_70 = arith.constant 2 : index
    %c0_71 = arith.constant 0 : index
    %c0_72 = arith.constant 0 : index
    %39 = vector.load %arg3[%c0_69, %c2_70, %c0_71, %c0_72] : memref<1x4x16x8xf32, #tpu.memory_space<vmem>>, vector<1x1x16x8xf32>
    %40 = vector.shape_cast %39 : vector<1x1x16x8xf32> to vector<16x8xf32>
    %c0_73 = arith.constant 0 : index
    %c3_74 = arith.constant 3 : index
    %c0_75 = arith.constant 0 : index
    %c0_76 = arith.constant 0 : index
    %41 = vector.load %arg3[%c0_73, %c3_74, %c0_75, %c0_76] : memref<1x4x16x8xf32, #tpu.memory_space<vmem>>, vector<1x1x16x8xf32>
    %42 = vector.shape_cast %41 : vector<1x1x16x8xf32> to vector<16x8xf32>
    %c0_77 = arith.constant 0 : index
    %c0_78 = arith.constant 0 : index
    %c0_79 = arith.constant 0 : index
    %c0_80 = arith.constant 0 : index
    %43 = vector.load %arg4[%c0_77, %c0_78, %c0_79, %c0_80] : memref<1x4x16x1xf32, #tpu.memory_space<vmem>>, vector<1x1x16x1xf32>
    %44 = vector.shape_cast %43 : vector<1x1x16x1xf32> to vector<16x1xf32>
    %c0_81 = arith.constant 0 : index
    %c1_82 = arith.constant 1 : index
    %c0_83 = arith.constant 0 : index
    %c0_84 = arith.constant 0 : index
    %45 = vector.load %arg4[%c0_81, %c1_82, %c0_83, %c0_84] : memref<1x4x16x1xf32, #tpu.memory_space<vmem>>, vector<1x1x16x1xf32>
    %46 = vector.shape_cast %45 : vector<1x1x16x1xf32> to vector<16x1xf32>
    %c0_85 = arith.constant 0 : index
    %c2_86 = arith.constant 2 : index
    %c0_87 = arith.constant 0 : index
    %c0_88 = arith.constant 0 : index
    %47 = vector.load %arg4[%c0_85, %c2_86, %c0_87, %c0_88] : memref<1x4x16x1xf32, #tpu.memory_space<vmem>>, vector<1x1x16x1xf32>
    %48 = vector.shape_cast %47 : vector<1x1x16x1xf32> to vector<16x1xf32>
    %c0_89 = arith.constant 0 : index
    %c3_90 = arith.constant 3 : index
    %c0_91 = arith.constant 0 : index
    %c0_92 = arith.constant 0 : index
    %49 = vector.load %arg4[%c0_89, %c3_90, %c0_91, %c0_92] : memref<1x4x16x1xf32, #tpu.memory_space<vmem>>, vector<1x1x16x1xf32>
    %50 = vector.shape_cast %49 : vector<1x1x16x1xf32> to vector<16x1xf32>
    %c0_93 = arith.constant 0 : index
    %c0_94 = arith.constant 0 : index
    %c0_95 = arith.constant 0 : index
    %51 = vector.load %arg7[%c0_93, %c0_94, %c0_95] : memref<4x8x128xf32, #tpu.memory_space<vmem>>, vector<1x8x128xf32>
    %52 = vector.shape_cast %51 : vector<1x8x128xf32> to vector<8x128xf32>
    %c1_96 = arith.constant 1 : index
    %c0_97 = arith.constant 0 : index
    %c0_98 = arith.constant 0 : index
    %53 = vector.load %arg7[%c1_96, %c0_97, %c0_98] : memref<4x8x128xf32, #tpu.memory_space<vmem>>, vector<1x8x128xf32>
    %54 = vector.shape_cast %53 : vector<1x8x128xf32> to vector<8x128xf32>
    %c2_99 = arith.constant 2 : index
    %c0_100 = arith.constant 0 : index
    %c0_101 = arith.constant 0 : index
    %55 = vector.load %arg7[%c2_99, %c0_100, %c0_101] : memref<4x8x128xf32, #tpu.memory_space<vmem>>, vector<1x8x128xf32>
    %56 = vector.shape_cast %55 : vector<1x8x128xf32> to vector<8x128xf32>
    %c3_102 = arith.constant 3 : index
    %c0_103 = arith.constant 0 : index
    %c0_104 = arith.constant 0 : index
    %57 = vector.load %arg7[%c3_102, %c0_103, %c0_104] : memref<4x8x128xf32, #tpu.memory_space<vmem>>, vector<1x8x128xf32>
    %58 = vector.shape_cast %57 : vector<1x8x128xf32> to vector<8x128xf32>
    %cst = arith.constant dense<0.000000e+00> : vector<16x128xf32>
    %59 = tpu.matmul %36, %52, %cst {dimension_numbers = #tpu.dot_dimension_numbers<[1], [0], [0], [1], [0, 0, 1, 1], [], []>} : vector<16x8xf32>, vector<8x128xf32>, vector<16x128xf32> -> vector<16x128xf32>
    %cst_105 = arith.constant dense<0.000000e+00> : vector<16x128xf32>
    %60 = tpu.matmul %38, %54, %cst_105 {dimension_numbers = #tpu.dot_dimension_numbers<[1], [0], [0], [1], [0, 0, 1, 1], [], []>} : vector<16x8xf32>, vector<8x128xf32>, vector<16x128xf32> -> vector<16x128xf32>
    %cst_106 = arith.constant dense<0.000000e+00> : vector<16x128xf32>
    %61 = tpu.matmul %40, %56, %cst_106 {dimension_numbers = #tpu.dot_dimension_numbers<[1], [0], [0], [1], [0, 0, 1, 1], [], []>} : vector<16x8xf32>, vector<8x128xf32>, vector<16x128xf32> -> vector<16x128xf32>
    %cst_107 = arith.constant dense<0.000000e+00> : vector<16x128xf32>
    %62 = tpu.matmul %42, %58, %cst_107 {dimension_numbers = #tpu.dot_dimension_numbers<[1], [0], [0], [1], [0, 0, 1, 1], [], []>} : vector<16x8xf32>, vector<8x128xf32>, vector<16x128xf32> -> vector<16x128xf32>
    %63 = vector.broadcast %3 : f32 to vector<16x128xf32>
    %64 = arith.mulf %63, %59 : vector<16x128xf32>
    %65 = vector.broadcast %4 : f32 to vector<16x128xf32>
    %66 = arith.mulf %65, %60 : vector<16x128xf32>
    %67 = arith.addf %64, %66 : vector<16x128xf32>
    %68 = vector.broadcast %5 : f32 to vector<16x128xf32>
    %69 = arith.mulf %68, %61 : vector<16x128xf32>
    %70 = arith.addf %67, %69 : vector<16x128xf32>
    %71 = vector.broadcast %6 : f32 to vector<16x128xf32>
    %72 = arith.mulf %71, %62 : vector<16x128xf32>
    %73 = arith.addf %70, %72 : vector<16x128xf32>
    %74 = vector.broadcast %7 : f32 to vector<16x128xf32>
    %75 = arith.mulf %74, %59 : vector<16x128xf32>
    %76 = vector.broadcast %8 : f32 to vector<16x128xf32>
    %77 = arith.mulf %76, %60 : vector<16x128xf32>
    %78 = arith.addf %75, %77 : vector<16x128xf32>
    %79 = vector.broadcast %9 : f32 to vector<16x128xf32>
    %80 = arith.mulf %79, %61 : vector<16x128xf32>
    %81 = arith.addf %78, %80 : vector<16x128xf32>
    %82 = vector.broadcast %10 : f32 to vector<16x128xf32>
    %83 = arith.mulf %82, %62 : vector<16x128xf32>
    %84 = arith.addf %81, %83 : vector<16x128xf32>
    %85 = vector.broadcast %11 : f32 to vector<16x128xf32>
    %86 = arith.mulf %85, %59 : vector<16x128xf32>
    %87 = vector.broadcast %12 : f32 to vector<16x128xf32>
    %88 = arith.mulf %87, %60 : vector<16x128xf32>
    %89 = arith.addf %86, %88 : vector<16x128xf32>
    %90 = vector.broadcast %13 : f32 to vector<16x128xf32>
    %91 = arith.mulf %90, %61 : vector<16x128xf32>
    %92 = arith.addf %89, %91 : vector<16x128xf32>
    %93 = vector.broadcast %14 : f32 to vector<16x128xf32>
    %94 = arith.mulf %93, %62 : vector<16x128xf32>
    %95 = arith.addf %92, %94 : vector<16x128xf32>
    %96 = vector.broadcast %15 : f32 to vector<16x128xf32>
    %97 = arith.mulf %96, %59 : vector<16x128xf32>
    %98 = vector.broadcast %16 : f32 to vector<16x128xf32>
    %99 = arith.mulf %98, %60 : vector<16x128xf32>
    %100 = arith.addf %97, %99 : vector<16x128xf32>
    %101 = vector.broadcast %17 : f32 to vector<16x128xf32>
    %102 = arith.mulf %101, %61 : vector<16x128xf32>
    %103 = arith.addf %100, %102 : vector<16x128xf32>
    %104 = vector.broadcast %18 : f32 to vector<16x128xf32>
    %105 = arith.mulf %104, %62 : vector<16x128xf32>
    %106 = arith.addf %103, %105 : vector<16x128xf32>
    %107 = vector.broadcast %44 : vector<16x1xf32> to vector<16x128xf32>
    %108 = arith.addf %73, %107 : vector<16x128xf32>
    %109 = math.tanh %108 : vector<16x128xf32>
    %110 = vector.broadcast %46 : vector<16x1xf32> to vector<16x128xf32>
    %111 = arith.addf %84, %110 : vector<16x128xf32>
    %112 = math.tanh %111 : vector<16x128xf32>
    %113 = vector.broadcast %48 : vector<16x1xf32> to vector<16x128xf32>
    %114 = arith.addf %95, %113 : vector<16x128xf32>
    %115 = math.tanh %114 : vector<16x128xf32>
    %116 = vector.broadcast %50 : vector<16x1xf32> to vector<16x128xf32>
    %117 = arith.addf %106, %116 : vector<16x128xf32>
    %118 = math.tanh %117 : vector<16x128xf32>
    %119 = vector.broadcast %19 : f32 to vector<16x128xf32>
    %120 = arith.mulf %119, %109 : vector<16x128xf32>
    %121 = vector.broadcast %20 : f32 to vector<16x128xf32>
    %122 = arith.mulf %121, %112 : vector<16x128xf32>
    %123 = arith.addf %120, %122 : vector<16x128xf32>
    %124 = vector.broadcast %21 : f32 to vector<16x128xf32>
    %125 = arith.mulf %124, %115 : vector<16x128xf32>
    %126 = arith.addf %123, %125 : vector<16x128xf32>
    %127 = vector.broadcast %22 : f32 to vector<16x128xf32>
    %128 = arith.mulf %127, %118 : vector<16x128xf32>
    %129 = arith.addf %126, %128 : vector<16x128xf32>
    %130 = vector.broadcast %23 : f32 to vector<16x128xf32>
    %131 = arith.mulf %130, %109 : vector<16x128xf32>
    %132 = vector.broadcast %24 : f32 to vector<16x128xf32>
    %133 = arith.mulf %132, %112 : vector<16x128xf32>
    %134 = arith.addf %131, %133 : vector<16x128xf32>
    %135 = vector.broadcast %25 : f32 to vector<16x128xf32>
    %136 = arith.mulf %135, %115 : vector<16x128xf32>
    %137 = arith.addf %134, %136 : vector<16x128xf32>
    %138 = vector.broadcast %26 : f32 to vector<16x128xf32>
    %139 = arith.mulf %138, %118 : vector<16x128xf32>
    %140 = arith.addf %137, %139 : vector<16x128xf32>
    %141 = vector.broadcast %27 : f32 to vector<16x128xf32>
    %142 = arith.mulf %141, %109 : vector<16x128xf32>
    %143 = vector.broadcast %28 : f32 to vector<16x128xf32>
    %144 = arith.mulf %143, %112 : vector<16x128xf32>
    %145 = arith.addf %142, %144 : vector<16x128xf32>
    %146 = vector.broadcast %29 : f32 to vector<16x128xf32>
    %147 = arith.mulf %146, %115 : vector<16x128xf32>
    %148 = arith.addf %145, %147 : vector<16x128xf32>
    %149 = vector.broadcast %30 : f32 to vector<16x128xf32>
    %150 = arith.mulf %149, %118 : vector<16x128xf32>
    %151 = arith.addf %148, %150 : vector<16x128xf32>
    %152 = vector.broadcast %31 : f32 to vector<16x128xf32>
    %153 = arith.mulf %152, %109 : vector<16x128xf32>
    %154 = vector.broadcast %32 : f32 to vector<16x128xf32>
    %155 = arith.mulf %154, %112 : vector<16x128xf32>
    %156 = arith.addf %153, %155 : vector<16x128xf32>
    %157 = vector.broadcast %33 : f32 to vector<16x128xf32>
    %158 = arith.mulf %157, %115 : vector<16x128xf32>
    %159 = arith.addf %156, %158 : vector<16x128xf32>
    %160 = vector.broadcast %34 : f32 to vector<16x128xf32>
    %161 = arith.mulf %160, %118 : vector<16x128xf32>
    %162 = arith.addf %159, %161 : vector<16x128xf32>
    %cst_108 = arith.constant dense<0.000000e+00> : vector<8x128xf32>
    %163 = tpu.matmul %36, %129, %cst_108 {dimension_numbers = #tpu.dot_dimension_numbers<[0], [0], [1], [1], [0, 1, 1, 1], [], []>} : vector<16x8xf32>, vector<16x128xf32>, vector<8x128xf32> -> vector<8x128xf32>
    %cst_109 = arith.constant dense<0.000000e+00> : vector<8x128xf32>
    %164 = tpu.matmul %38, %140, %cst_109 {dimension_numbers = #tpu.dot_dimension_numbers<[0], [0], [1], [1], [0, 1, 1, 1], [], []>} : vector<16x8xf32>, vector<16x128xf32>, vector<8x128xf32> -> vector<8x128xf32>
    %cst_110 = arith.constant dense<0.000000e+00> : vector<8x128xf32>
    %165 = tpu.matmul %40, %151, %cst_110 {dimension_numbers = #tpu.dot_dimension_numbers<[0], [0], [1], [1], [0, 1, 1, 1], [], []>} : vector<16x8xf32>, vector<16x128xf32>, vector<8x128xf32> -> vector<8x128xf32>
    %cst_111 = arith.constant dense<0.000000e+00> : vector<8x128xf32>
    %166 = tpu.matmul %42, %162, %cst_111 {dimension_numbers = #tpu.dot_dimension_numbers<[0], [0], [1], [1], [0, 1, 1, 1], [], []>} : vector<16x8xf32>, vector<16x128xf32>, vector<8x128xf32> -> vector<8x128xf32>
    %c0_112 = arith.constant 0 : index
    %c0_113 = arith.constant 0 : index
    %c0_114 = arith.constant 0 : index
    %167 = vector.load %arg8[%c0_112, %c0_113, %c0_114] : memref<4x8x128xf32, #tpu.memory_space<vmem>>, vector<1x8x128xf32>
    %168 = vector.shape_cast %167 : vector<1x8x128xf32> to vector<8x128xf32>
    %169 = arith.subf %168, %163 : vector<8x128xf32>
    %c1_115 = arith.constant 1 : index
    %c0_116 = arith.constant 0 : index
    %c0_117 = arith.constant 0 : index
    %170 = vector.load %arg8[%c1_115, %c0_116, %c0_117] : memref<4x8x128xf32, #tpu.memory_space<vmem>>, vector<1x8x128xf32>
    %171 = vector.shape_cast %170 : vector<1x8x128xf32> to vector<8x128xf32>
    %172 = arith.subf %171, %164 : vector<8x128xf32>
    %c2_118 = arith.constant 2 : index
    %c0_119 = arith.constant 0 : index
    %c0_120 = arith.constant 0 : index
    %173 = vector.load %arg8[%c2_118, %c0_119, %c0_120] : memref<4x8x128xf32, #tpu.memory_space<vmem>>, vector<1x8x128xf32>
    %174 = vector.shape_cast %173 : vector<1x8x128xf32> to vector<8x128xf32>
    %175 = arith.subf %174, %165 : vector<8x128xf32>
    %c3_121 = arith.constant 3 : index
    %c0_122 = arith.constant 0 : index
    %c0_123 = arith.constant 0 : index
    %176 = vector.load %arg8[%c3_121, %c0_122, %c0_123] : memref<4x8x128xf32, #tpu.memory_space<vmem>>, vector<1x8x128xf32>
    %177 = vector.shape_cast %176 : vector<1x8x128xf32> to vector<8x128xf32>
    %178 = arith.subf %177, %166 : vector<8x128xf32>
    %c0_124 = arith.constant 0 : index
    %c0_125 = arith.constant 0 : index
    %c0_126 = arith.constant 0 : index
    %179 = vector.load %arg8[%c0_124, %c0_125, %c0_126] : memref<4x8x128xf32, #tpu.memory_space<vmem>>, vector<1x8x128xf32>
    %180 = vector.shape_cast %179 : vector<1x8x128xf32> to vector<8x128xf32>
    %181 = vector.shape_cast %169 : vector<8x128xf32> to vector<1x8x128xf32>
    tpu.vector_store %arg8[%c0_124, %c0_125, %c0_126], %181 {strides = array<i32>} : memref<4x8x128xf32, #tpu.memory_space<vmem>>, vector<1x8x128xf32>,
    %c1_127 = arith.constant 1 : index
    %c0_128 = arith.constant 0 : index
    %c0_129 = arith.constant 0 : index
    %182 = vector.load %arg8[%c1_127, %c0_128, %c0_129] : memref<4x8x128xf32, #tpu.memory_space<vmem>>, vector<1x8x128xf32>
    %183 = vector.shape_cast %182 : vector<1x8x128xf32> to vector<8x128xf32>
    %184 = vector.shape_cast %172 : vector<8x128xf32> to vector<1x8x128xf32>
    tpu.vector_store %arg8[%c1_127, %c0_128, %c0_129], %184 {strides = array<i32>} : memref<4x8x128xf32, #tpu.memory_space<vmem>>, vector<1x8x128xf32>,
    %c2_130 = arith.constant 2 : index
    %c0_131 = arith.constant 0 : index
    %c0_132 = arith.constant 0 : index
    %185 = vector.load %arg8[%c2_130, %c0_131, %c0_132] : memref<4x8x128xf32, #tpu.memory_space<vmem>>, vector<1x8x128xf32>
    %186 = vector.shape_cast %185 : vector<1x8x128xf32> to vector<8x128xf32>
    %187 = vector.shape_cast %175 : vector<8x128xf32> to vector<1x8x128xf32>
    tpu.vector_store %arg8[%c2_130, %c0_131, %c0_132], %187 {strides = array<i32>} : memref<4x8x128xf32, #tpu.memory_space<vmem>>, vector<1x8x128xf32>,
    %c3_133 = arith.constant 3 : index
    %c0_134 = arith.constant 0 : index
    %c0_135 = arith.constant 0 : index
    %188 = vector.load %arg8[%c3_133, %c0_134, %c0_135] : memref<4x8x128xf32, #tpu.memory_space<vmem>>, vector<1x8x128xf32>
    %189 = vector.shape_cast %188 : vector<1x8x128xf32> to vector<8x128xf32>
    %190 = vector.shape_cast %178 : vector<8x128xf32> to vector<1x8x128xf32>
    tpu.vector_store %arg8[%c3_133, %c0_134, %c0_135], %190 {strides = array<i32>} : memref<4x8x128xf32, #tpu.memory_space<vmem>>, vector<1x8x128xf32>,
    %cst_136 = arith.constant dense<0.000000e+00> : vector<16x128xf32>
    %191 = tpu.matmul %36, %169, %cst_136 {dimension_numbers = #tpu.dot_dimension_numbers<[1], [0], [0], [1], [0, 0, 1, 1], [], []>} : vector<16x8xf32>, vector<8x128xf32>, vector<16x128xf32> -> vector<16x128xf32>
    %cst_137 = arith.constant dense<0.000000e+00> : vector<16x128xf32>
    %192 = tpu.matmul %38, %172, %cst_137 {dimension_numbers = #tpu.dot_dimension_numbers<[1], [0], [0], [1], [0, 0, 1, 1], [], []>} : vector<16x8xf32>, vector<8x128xf32>, vector<16x128xf32> -> vector<16x128xf32>
    %cst_138 = arith.constant dense<0.000000e+00> : vector<16x128xf32>
    %193 = tpu.matmul %40, %175, %cst_138 {dimension_numbers = #tpu.dot_dimension_numbers<[1], [0], [0], [1], [0, 0, 1, 1], [], []>} : vector<16x8xf32>, vector<8x128xf32>, vector<16x128xf32> -> vector<16x128xf32>
    %cst_139 = arith.constant dense<0.000000e+00> : vector<16x128xf32>
    %194 = tpu.matmul %42, %178, %cst_139 {dimension_numbers = #tpu.dot_dimension_numbers<[1], [0], [0], [1], [0, 0, 1, 1], [], []>} : vector<16x8xf32>, vector<8x128xf32>, vector<16x128xf32> -> vector<16x128xf32>
    %195 = vector.broadcast %3 : f32 to vector<16x128xf32>
    %196 = arith.mulf %195, %191 : vector<16x128xf32>
    %197 = vector.broadcast %4 : f32 to vector<16x128xf32>
    %198 = arith.mulf %197, %192 : vector<16x128xf32>
    %199 = arith.addf %196, %198 : vector<16x128xf32>
    %200 = vector.broadcast %5 : f32 to vector<16x128xf32>
    %201 = arith.mulf %200, %193 : vector<16x128xf32>
    %202 = arith.addf %199, %201 : vector<16x128xf32>
    %203 = vector.broadcast %6 : f32 to vector<16x128xf32>
    %204 = arith.mulf %203, %194 : vector<16x128xf32>
    %205 = arith.addf %202, %204 : vector<16x128xf32>
    %206 = vector.broadcast %7 : f32 to vector<16x128xf32>
    %207 = arith.mulf %206, %191 : vector<16x128xf32>
    %208 = vector.broadcast %8 : f32 to vector<16x128xf32>
    %209 = arith.mulf %208, %192 : vector<16x128xf32>
    %210 = arith.addf %207, %209 : vector<16x128xf32>
    %211 = vector.broadcast %9 : f32 to vector<16x128xf32>
    %212 = arith.mulf %211, %193 : vector<16x128xf32>
    %213 = arith.addf %210, %212 : vector<16x128xf32>
    %214 = vector.broadcast %10 : f32 to vector<16x128xf32>
    %215 = arith.mulf %214, %194 : vector<16x128xf32>
    %216 = arith.addf %213, %215 : vector<16x128xf32>
    %217 = vector.broadcast %11 : f32 to vector<16x128xf32>
    %218 = arith.mulf %217, %191 : vector<16x128xf32>
    %219 = vector.broadcast %12 : f32 to vector<16x128xf32>
    %220 = arith.mulf %219, %192 : vector<16x128xf32>
    %221 = arith.addf %218, %220 : vector<16x128xf32>
    %222 = vector.broadcast %13 : f32 to vector<16x128xf32>
    %223 = arith.mulf %222, %193 : vector<16x128xf32>
    %224 = arith.addf %221, %223 : vector<16x128xf32>
    %225 = vector.broadcast %14 : f32 to vector<16x128xf32>
    %226 = arith.mulf %225, %194 : vector<16x128xf32>
    %227 = arith.addf %224, %226 : vector<16x128xf32>
    %228 = vector.broadcast %15 : f32 to vector<16x128xf32>
    %229 = arith.mulf %228, %191 : vector<16x128xf32>
    %230 = vector.broadcast %16 : f32 to vector<16x128xf32>
    %231 = arith.mulf %230, %192 : vector<16x128xf32>
    %232 = arith.addf %229, %231 : vector<16x128xf32>
    %233 = vector.broadcast %17 : f32 to vector<16x128xf32>
    %234 = arith.mulf %233, %193 : vector<16x128xf32>
    %235 = arith.addf %232, %234 : vector<16x128xf32>
    %236 = vector.broadcast %18 : f32 to vector<16x128xf32>
    %237 = arith.mulf %236, %194 : vector<16x128xf32>
    %238 = arith.addf %235, %237 : vector<16x128xf32>
    %239 = vector.broadcast %44 : vector<16x1xf32> to vector<16x128xf32>
    %240 = arith.addf %205, %239 : vector<16x128xf32>
    %241 = math.tanh %240 : vector<16x128xf32>
    %242 = vector.broadcast %46 : vector<16x1xf32> to vector<16x128xf32>
    %243 = arith.addf %216, %242 : vector<16x128xf32>
    %244 = math.tanh %243 : vector<16x128xf32>
    %245 = vector.broadcast %48 : vector<16x1xf32> to vector<16x128xf32>
    %246 = arith.addf %227, %245 : vector<16x128xf32>
    %247 = math.tanh %246 : vector<16x128xf32>
    %248 = vector.broadcast %50 : vector<16x1xf32> to vector<16x128xf32>
    %249 = arith.addf %238, %248 : vector<16x128xf32>
    %250 = math.tanh %249 : vector<16x128xf32>
    %251 = vector.broadcast %19 : f32 to vector<16x128xf32>
    %252 = arith.mulf %251, %241 : vector<16x128xf32>
    %253 = vector.broadcast %20 : f32 to vector<16x128xf32>
    %254 = arith.mulf %253, %244 : vector<16x128xf32>
    %255 = arith.addf %252, %254 : vector<16x128xf32>
    %256 = vector.broadcast %21 : f32 to vector<16x128xf32>
    %257 = arith.mulf %256, %247 : vector<16x128xf32>
    %258 = arith.addf %255, %257 : vector<16x128xf32>
    %259 = vector.broadcast %22 : f32 to vector<16x128xf32>
    %260 = arith.mulf %259, %250 : vector<16x128xf32>
    %261 = arith.addf %258, %260 : vector<16x128xf32>
    %262 = vector.broadcast %23 : f32 to vector<16x128xf32>
    %263 = arith.mulf %262, %241 : vector<16x128xf32>
    %264 = vector.broadcast %24 : f32 to vector<16x128xf32>
    %265 = arith.mulf %264, %244 : vector<16x128xf32>
    %266 = arith.addf %263, %265 : vector<16x128xf32>
    %267 = vector.broadcast %25 : f32 to vector<16x128xf32>
    %268 = arith.mulf %267, %247 : vector<16x128xf32>
    %269 = arith.addf %266, %268 : vector<16x128xf32>
    %270 = vector.broadcast %26 : f32 to vector<16x128xf32>
    %271 = arith.mulf %270, %250 : vector<16x128xf32>
    %272 = arith.addf %269, %271 : vector<16x128xf32>
    %273 = vector.broadcast %27 : f32 to vector<16x128xf32>
    %274 = arith.mulf %273, %241 : vector<16x128xf32>
    %275 = vector.broadcast %28 : f32 to vector<16x128xf32>
    %276 = arith.mulf %275, %244 : vector<16x128xf32>
    %277 = arith.addf %274, %276 : vector<16x128xf32>
    %278 = vector.broadcast %29 : f32 to vector<16x128xf32>
    %279 = arith.mulf %278, %247 : vector<16x128xf32>
    %280 = arith.addf %277, %279 : vector<16x128xf32>
    %281 = vector.broadcast %30 : f32 to vector<16x128xf32>
    %282 = arith.mulf %281, %250 : vector<16x128xf32>
    %283 = arith.addf %280, %282 : vector<16x128xf32>
    %284 = vector.broadcast %31 : f32 to vector<16x128xf32>
    %285 = arith.mulf %284, %241 : vector<16x128xf32>
    %286 = vector.broadcast %32 : f32 to vector<16x128xf32>
    %287 = arith.mulf %286, %244 : vector<16x128xf32>
    %288 = arith.addf %285, %287 : vector<16x128xf32>
    %289 = vector.broadcast %33 : f32 to vector<16x128xf32>
    %290 = arith.mulf %289, %247 : vector<16x128xf32>
    %291 = arith.addf %288, %290 : vector<16x128xf32>
    %292 = vector.broadcast %34 : f32 to vector<16x128xf32>
    %293 = arith.mulf %292, %250 : vector<16x128xf32>
    %294 = arith.addf %291, %293 : vector<16x128xf32>
    %cst_140 = arith.constant dense<0.000000e+00> : vector<8x128xf32>
    %295 = tpu.matmul %36, %261, %cst_140 {dimension_numbers = #tpu.dot_dimension_numbers<[0], [0], [1], [1], [0, 1, 1, 1], [], []>} : vector<16x8xf32>, vector<16x128xf32>, vector<8x128xf32> -> vector<8x128xf32>
    %cst_141 = arith.constant dense<0.000000e+00> : vector<8x128xf32>
    %296 = tpu.matmul %38, %272, %cst_141 {dimension_numbers = #tpu.dot_dimension_numbers<[0], [0], [1], [1], [0, 1, 1, 1], [], []>} : vector<16x8xf32>, vector<16x128xf32>, vector<8x128xf32> -> vector<8x128xf32>
    %cst_142 = arith.constant dense<0.000000e+00> : vector<8x128xf32>
    %297 = tpu.matmul %40, %283, %cst_142 {dimension_numbers = #tpu.dot_dimension_numbers<[0], [0], [1], [1], [0, 1, 1, 1], [], []>} : vector<16x8xf32>, vector<16x128xf32>, vector<8x128xf32> -> vector<8x128xf32>
    %cst_143 = arith.constant dense<0.000000e+00> : vector<8x128xf32>
    %298 = tpu.matmul %42, %294, %cst_143 {dimension_numbers = #tpu.dot_dimension_numbers<[0], [0], [1], [1], [0, 1, 1, 1], [], []>} : vector<16x8xf32>, vector<16x128xf32>, vector<8x128xf32> -> vector<8x128xf32>
    %299 = arith.addf %52, %295 : vector<8x128xf32>
    %c0_144 = arith.constant 0 : index
    %c0_145 = arith.constant 0 : index
    %c0_146 = arith.constant 0 : index
    %300 = vector.load %arg7[%c0_144, %c0_145, %c0_146] : memref<4x8x128xf32, #tpu.memory_space<vmem>>, vector<1x8x128xf32>
    %301 = vector.shape_cast %300 : vector<1x8x128xf32> to vector<8x128xf32>
    %302 = vector.shape_cast %299 : vector<8x128xf32> to vector<1x8x128xf32>
    tpu.vector_store %arg7[%c0_144, %c0_145, %c0_146], %302 {strides = array<i32>} : memref<4x8x128xf32, #tpu.memory_space<vmem>>, vector<1x8x128xf32>,
    %303 = arith.addf %54, %296 : vector<8x128xf32>
    %c1_147 = arith.constant 1 : index
    %c0_148 = arith.constant 0 : index
    %c0_149 = arith.constant 0 : index
    %304 = vector.load %arg7[%c1_147, %c0_148, %c0_149] : memref<4x8x128xf32, #tpu.memory_space<vmem>>, vector<1x8x128xf32>
    %305 = vector.shape_cast %304 : vector<1x8x128xf32> to vector<8x128xf32>
    %306 = vector.shape_cast %303 : vector<8x128xf32> to vector<1x8x128xf32>
    tpu.vector_store %arg7[%c1_147, %c0_148, %c0_149], %306 {strides = array<i32>} : memref<4x8x128xf32, #tpu.memory_space<vmem>>, vector<1x8x128xf32>,
    %307 = arith.addf %56, %297 : vector<8x128xf32>
    %c2_150 = arith.constant 2 : index
    %c0_151 = arith.constant 0 : index
    %c0_152 = arith.constant 0 : index
    %308 = vector.load %arg7[%c2_150, %c0_151, %c0_152] : memref<4x8x128xf32, #tpu.memory_space<vmem>>, vector<1x8x128xf32>
    %309 = vector.shape_cast %308 : vector<1x8x128xf32> to vector<8x128xf32>
    %310 = vector.shape_cast %307 : vector<8x128xf32> to vector<1x8x128xf32>
    tpu.vector_store %arg7[%c2_150, %c0_151, %c0_152], %310 {strides = array<i32>} : memref<4x8x128xf32, #tpu.memory_space<vmem>>, vector<1x8x128xf32>,
    %311 = arith.addf %58, %298 : vector<8x128xf32>
    %c3_153 = arith.constant 3 : index
    %c0_154 = arith.constant 0 : index
    %c0_155 = arith.constant 0 : index
    %312 = vector.load %arg7[%c3_153, %c0_154, %c0_155] : memref<4x8x128xf32, #tpu.memory_space<vmem>>, vector<1x8x128xf32>
    %313 = vector.shape_cast %312 : vector<1x8x128xf32> to vector<8x128xf32>
    %314 = vector.shape_cast %311 : vector<8x128xf32> to vector<1x8x128xf32>
    tpu.vector_store %arg7[%c3_153, %c0_154, %c0_155], %314 {strides = array<i32>} : memref<4x8x128xf32, #tpu.memory_space<vmem>>, vector<1x8x128xf32>,
    return
  }
  func.func @transform_0(%arg0: i32, %arg1: i32) -> (i32, i32, i32) {
    %c0_i32 = arith.constant 0 : i32
    %c0_i32_0 = arith.constant 0 : i32
    %c0_i32_1 = arith.constant 0 : i32
    return %c0_i32, %c0_i32_0, %arg0 : i32, i32, i32
  }
  func.func @transform_1(%arg0: i32, %arg1: i32) -> (i32, i32, i32, i32) {
    %c0_i32 = arith.constant 0 : i32
    %c0_i32_0 = arith.constant 0 : i32
    %c0_i32_1 = arith.constant 0 : i32
    %c0_i32_2 = arith.constant 0 : i32
    return %arg1, %c0_i32, %c0_i32_0, %c0_i32_1 : i32, i32, i32, i32
  }
  func.func @transform_2(%arg0: i32, %arg1: i32) -> (i32, i32, i32, i32) {
    %c0_i32 = arith.constant 0 : i32
    %c0_i32_0 = arith.constant 0 : i32
    %c0_i32_1 = arith.constant 0 : i32
    %c0_i32_2 = arith.constant 0 : i32
    return %arg1, %c0_i32, %c0_i32_0, %c0_i32_1 : i32, i32, i32, i32
  }
  func.func @transform_3(%arg0: i32, %arg1: i32) -> (i32, i32) {
    %c0_i32 = arith.constant 0 : i32
    %c0_i32_0 = arith.constant 0 : i32
    %c0_i32_1 = arith.constant 0 : i32
    return %c0_i32, %c0_i32_0 : i32, i32
  }
  func.func @transform_4(%arg0: i32, %arg1: i32) -> (i32, i32) {
    %c0_i32 = arith.constant 0 : i32
    %c0_i32_0 = arith.constant 0 : i32
    %c0_i32_1 = arith.constant 0 : i32
    return %c0_i32, %c0_i32_0 : i32, i32
  }
  func.func @transform_5(%arg0: i32, %arg1: i32) -> (i32, i32, i32) {
    %c0_i32 = arith.constant 0 : i32
    %c0_i32_0 = arith.constant 0 : i32
    %c0_i32_1 = arith.constant 0 : i32
    return %c0_i32, %c0_i32_0, %arg0 : i32, i32, i32
  }
}

</mosaic_0001>

<llo_original>
// kernel: tpu_custom_call.1
$region0: #{tpu_custom_call.1}
  #allocation0 [shape = 'u32[]', space=smem, size = 0x4, offset = 0x4, fixed_abs, tag = 'smem constant byte address 0x4 - core index']
  #allocation1 [shape = 'u32[144,128]{1,0:T(1,128)}', space=vmem, size = 0x12000, scoped, tag = 'internal scratch']
  #allocation2 [shape = 'f32[4,8,128]{2,1,0:T(8,128)}', space=vmem, size = 0x4000, scoped, tag = 'scratch operand']
  %s0 = inlined_call_operand.vmem [shape: f32[4,8,256], index: 0, kind: input, shape index: {}]
  %s1 = inlined_call_operand.vmem [shape: f32[3,4,16,8], index: 1, kind: input, shape index: {}]
  %s2 = inlined_call_operand.vmem [shape: f32[3,4,16,1], index: 2, kind: input, shape index: {}]
  %s3 = inlined_call_operand.vmem [shape: f32[4,4], index: 3, kind: input, shape index: {}]
  %s4 = inlined_call_operand.vmem [shape: f32[4,4], index: 4, kind: input, shape index: {}]
  %s5 = inlined_call_operand.hbm [shape: f32[4,8,256], index: 5, kind: output, shape index: {}]
  %s6 = sld [smem:[#allocation0]]
  $region103: #{tpu_custom_call.1} parent=0
    _
  %s8 = ssub.s32 1, %s6
  %s9 = scalar_select 0, %s8, %s6
  $region1: #{tpu_custom_call.1} parent=0
    #allocation3 [shape = 'u8[32768]{0}', space=vmem, size = 0x8000, scoped, tag = 'input window, operand 0']
    #allocation4 [shape = 'u8[2048]{0}', space=smem, size = 0x800, scoped, tag = 'input window, operand 3, single buffered']
    #allocation5 [shape = 's32[2]{0}', space=sflag, size = 0x8, scoped, tag = 'scoped memory for tpu_custom_call.1']
    #allocation6 [shape = 's32[2]{0}', space=sflag, size = 0x8, scoped, tag = 'scoped memory for tpu_custom_call.1']
    #allocation7 [shape = 'u8[2048]{0}', space=smem, size = 0x800, scoped, tag = 'input window, operand 4, single buffered']
    #allocation8 [shape = 's32[1]{0}', space=sflag, size = 0x4, scoped, tag = 'scoped memory for tpu_custom_call.1']
    #allocation9 [shape = 'u8[32768]{0}', space=vmem, size = 0x8000, scoped, tag = 'output window, operand 0']
    %10 = vsyncpa [#allocation6], 0
    %11 = vsyncpa [#allocation8], 0
    %12 = vsyncpa [#allocation5], 0
    %s13 = scalar_lea.sflag [#allocation5], 1
    %14 = vsyncpa %s13, 0
    loop: start=0, step=1, limit=8
    $region2: #{tpu_custom_call.1} parent=1 // loop_pre_header
      _
    $region3: #{tpu_custom_call.1} parent=1 // loop_header
      %s16 = sphi 0, %s20
      %p17 = scmp.ge.s32.totalorder %s16, 8
      %s23 = sphi 0, %s35
      %s24 = sphi 0, %s31
      %s25 = sphi 0, %s23
      %s26 = sphi 0, %s24
      %s27 = sphi 0, %s25
      %s28 = sphi 0, %s26
      %s38 = sphi 0, %s40
      %s41 = sphi 0, %s38
      %s42 = sphi 0, %s41
      %s58 = sphi 0, %s42
      %s64 = sphi 0, %s66
      %s67 = sphi 0, %s64
      %s68 = sphi 0, %s67
      %s84 = sphi 0, %s68
      %s90 = sphi 0, %s92
      %s93 = sphi 0, %s90
      %s94 = sphi 0, %s93
      %s110 = sphi 0, %s94
      %s114 = sphi 0, %s114
      %s116 = sphi 0, %s114
      %s117 = sphi 0, %s116
      %s131 = sphi 0, %s117
      %s135 = sphi 0, %s135
      %s137 = sphi 0, %s135
      %s138 = sphi 0, %s137
      %s152 = sphi 0, %s138
      %s158 = sphi 0, %s160
      %s161 = sphi 0, %s158
      %s162 = sphi 0, %s161
      %s178 = sphi 0, %s162
    $region4: #{tpu_custom_call.1} parent=1 // loop_header_branch
      %19 = sbr.rel (%p17) target = $region8
    $region5: #{tpu_custom_call.1} parent=1 // loop_body
      %s21 = ssub.s32 %s16, 1
      %s22 = ssub.s32 %s16, 2
      %s29 = sadd.s32 1, %s24
      %p30 = scmp.ge.s32.totalorder %s29, 3
      %s31 = scalar_select %p30, 0, %s29
      %s32 = sadd.s32 1, %s23
      %s33 = scalar_select %p30, %s32, %s23
      %p34 = scmp.ge.s32.totalorder %s33, 2
      %s35 = scalar_select %p34, 0, %s33
      %s36 = ssub.s32 %s23, %s35
      %p37 = scmp.eq.s32.totalorder %s36, 0
      %s39 = sadd.s32 %s38, 1
      %s40 = scalar_select %p37, %s38, %s39
      %p43 = pneg %p37
      %p44 = scmp.eq.s32.totalorder %s16, 5
      %p45 = por %p43, %p44
      %p46 = scmp.ne.s32.totalorder %s38, %s41
      %p47 = scmp.eq.s32.totalorder %s16, 0
      %p48 = por %p46, %p47
      %p49 = scmp.ne.s32.totalorder %s38, %s41
      %p50 = scmp.eq.s32.totalorder %s21, 5
      %p51 = por %p49, %p50
      %p52 = scmp.ne.s32.totalorder %s41, %s42
      %p53 = scmp.eq.s32.totalorder %s21, 0
      %p54 = por %p52, %p53
      %p55 = scmp.ne.s32.totalorder %s41, %s42
      %p56 = scmp.eq.s32.totalorder %s22, 5
      %p57 = por %p55, %p56
      %p59 = scmp.ne.s32.totalorder %s42, %s58
      %p60 = scmp.eq.s32.totalorder %s22, 0
      %p61 = por %p59, %p60
      %s62 = ssub.s32 %s24, %s31
      %p63 = scmp.eq.s32.totalorder %s62, 0
      %s65 = sadd.s32 %s64, 1
      %s66 = scalar_select %p63, %s64, %s65
      %p69 = pneg %p63
      %p70 = scmp.eq.s32.totalorder %s16, 5
      %p71 = por %p69, %p70
      %p72 = scmp.ne.s32.totalorder %s64, %s67
      %p73 = scmp.eq.s32.totalorder %s16, 0
      %p74 = por %p72, %p73
      %p75 = scmp.ne.s32.totalorder %s64, %s67
      %p76 = scmp.eq.s32.totalorder %s21, 5
      %p77 = por %p75, %p76
      %p78 = scmp.ne.s32.totalorder %s67, %s68
      %p79 = scmp.eq.s32.totalorder %s21, 0
      %p80 = por %p78, %p79
      %p81 = scmp.ne.s32.totalorder %s67, %s68
      %p82 = scmp.eq.s32.totalorder %s22, 5
      %p83 = por %p81, %p82
      %p85 = scmp.ne.s32.totalorder %s68, %s84
      %p86 = scmp.eq.s32.totalorder %s22, 0
      %p87 = por %p85, %p86
      %s88 = ssub.s32 %s24, %s31
      %p89 = scmp.eq.s32.totalorder %s88, 0
      %s91 = sadd.s32 %s90, 1
      %s92 = scalar_select %p89, %s90, %s91
      %p95 = pneg %p89
      %p96 = scmp.eq.s32.totalorder %s16, 5
      %p97 = por %p95, %p96
      %p98 = scmp.ne.s32.totalorder %s90, %s93
      %p99 = scmp.eq.s32.totalorder %s16, 0
      %p100 = por %p98, %p99
      %p101 = scmp.ne.s32.totalorder %s90, %s93
      %p102 = scmp.eq.s32.totalorder %s21, 5
      %p103 = por %p101, %p102
      %p104 = scmp.ne.s32.totalorder %s93, %s94
      %p105 = scmp.eq.s32.totalorder %s21, 0
      %p106 = por %p104, %p105
      %p107 = scmp.ne.s32.totalorder %s93, %s94
      %p108 = scmp.eq.s32.totalorder %s22, 5
      %p109 = por %p107, %p108
      %p111 = scmp.ne.s32.totalorder %s94, %s110
      %p112 = scmp.eq.s32.totalorder %s22, 0
      %p113 = por %p111, %p112
      %s115 = sadd.s32 %s114, 1
      %p118 = scmp.eq.s32.totalorder %s16, 5
      %p119 = scmp.ne.s32.totalorder %s114, %s116
      %p120 = scmp.eq.s32.totalorder %s16, 0
      %p121 = por %p119, %p120
      %p122 = scmp.ne.s32.totalorder %s114, %s116
      %p123 = scmp.eq.s32.totalorder %s21, 5
      %p124 = por %p122, %p123
      %p125 = scmp.ne.s32.totalorder %s116, %s117
      %p126 = scmp.eq.s32.totalorder %s21, 0
      %p127 = por %p125, %p126
      %p128 = scmp.ne.s32.totalorder %s116, %s117
      %p129 = scmp.eq.s32.totalorder %s22, 5
      %p130 = por %p128, %p129
      %p132 = scmp.ne.s32.totalorder %s117, %s131
      %p133 = scmp.eq.s32.totalorder %s22, 0
      %p134 = por %p132, %p133
      %s136 = sadd.s32 %s135, 1
      %p139 = scmp.eq.s32.totalorder %s16, 5
      %p140 = scmp.ne.s32.totalorder %s135, %s137
      %p141 = scmp.eq.s32.totalorder %s16, 0
      %p142 = por %p140, %p141
      %p143 = scmp.ne.s32.totalorder %s135, %s137
      %p144 = scmp.eq.s32.totalorder %s21, 5
      %p145 = por %p143, %p144
      %p146 = scmp.ne.s32.totalorder %s137, %s138
      %p147 = scmp.eq.s32.totalorder %s21, 0
      %p148 = por %p146, %p147
      %p149 = scmp.ne.s32.totalorder %s137, %s138
      %p150 = scmp.eq.s32.totalorder %s22, 5
      %p151 = por %p149, %p150
      %p153 = scmp.ne.s32.totalorder %s138, %s152
      %p154 = scmp.eq.s32.totalorder %s22, 0
      %p155 = por %p153, %p154
      %s156 = ssub.s32 %s23, %s35
      %p157 = scmp.eq.s32.totalorder %s156, 0
      %s159 = sadd.s32 %s158, 1
      %s160 = scalar_select %p157, %s158, %s159
      %p163 = pneg %p157
      %p164 = scmp.eq.s32.totalorder %s16, 5
      %p165 = por %p163, %p164
      %p166 = scmp.ne.s32.totalorder %s158, %s161
      %p167 = scmp.eq.s32.totalorder %s16, 0
      %p168 = por %p166, %p167
      %p169 = scmp.ne.s32.totalorder %s158, %s161
      %p170 = scmp.eq.s32.totalorder %s21, 5
      %p171 = por %p169, %p170
      %p172 = scmp.ne.s32.totalorder %s161, %s162
      %p173 = scmp.eq.s32.totalorder %s21, 0
      %p174 = por %p172, %p173
      %p175 = scmp.ne.s32.totalorder %s161, %s162
      %p176 = scmp.eq.s32.totalorder %s22, 5
      %p177 = por %p175, %p176
      %p179 = scmp.ne.s32.totalorder %s162, %s178
      %p180 = scmp.eq.s32.totalorder %s22, 0
      %p181 = por %p179, %p180
      %p182 = scmp.le.s32.totalorder 1, %s16
      %p183 = scmp.lt.s32.totalorder %s16, 7
      %p184 = pnand %p182, %p183
      %p185 = pneg %p184
      // Predicated region
      $region9: #{tpu_custom_call.1} parent=5 // pred_check
        _
      $region10: #{tpu_custom_call.1} parent=5 // pred_check_branch
        %187 = sbr.rel (%p184) target = $region12
      $region11: #{tpu_custom_call.1} parent=5 // pred_region
        %s188 = ssub.s32 %s16, 1
        // Predicated region
        $region13: #{tpu_custom_call.1} parent=11 // pred_check
          %p189 = pneg %p127
        $region14: #{tpu_custom_call.1} parent=11 // pred_check_branch
          %191 = sbr.rel (%p189) target = $region16
        $region15: #{tpu_custom_call.1} parent=11 // pred_region
          %s193 = ssub.s32 64, 64
          %194 = vsyncadd [#allocation6], %s193
          %s196 = sshll.u32 %s3, 4
          %s197 = int_to_ptr.vmem [resolvable:$true] %s196
          %199 = dma.vmem_to_smem %s197, 64, [#allocation4], [#allocation6]
        $region16: #{tpu_custom_call.1} parent=11 // pred_fallthru
          _
        // Predicated region
        $region17: #{tpu_custom_call.1} parent=11 // pred_check
          %p200 = pneg %p148
        $region18: #{tpu_custom_call.1} parent=11 // pred_check_branch
          %202 = sbr.rel (%p200) target = $region20
        $region19: #{tpu_custom_call.1} parent=11 // pred_region
          %s204 = ssub.s32 64, 64
          %205 = vsyncadd [#allocation8], %s204
          %s207 = sshll.u32 %s4, 4
          %s208 = int_to_ptr.vmem [resolvable:$true] %s207
          %210 = dma.vmem_to_smem %s208, 64, [#allocation7], [#allocation8]
        $region20: #{tpu_custom_call.1} parent=11 // pred_fallthru
          _
      $region12: #{tpu_custom_call.1} parent=5 // pred_fallthru
        _
      %p211 = scmp.lt.s32.totalorder %s16, 6
      // Predicated region
      $region21: #{tpu_custom_call.1} parent=5 // pred_check
        %p212 = pneg %p211
      $region22: #{tpu_custom_call.1} parent=5 // pred_check_branch
        %214 = sbr.rel (%p212) target = $region24
      $region23: #{tpu_custom_call.1} parent=5 // pred_region
        // Predicated region
        $region25: #{tpu_custom_call.1} parent=23 // pred_check
          %p215 = pneg %p48
        $region26: #{tpu_custom_call.1} parent=23 // pred_check_branch
          %217 = sbr.rel (%p215) target = $region28
        $region27: #{tpu_custom_call.1} parent=23 // pred_region
          %s218 = sand.u32 %s38, 1
          %s219 = sand.u32 %s38, 1
          %s220 = smul.addr %s219, 32
          %s221 = scalar_lea.vmem [#allocation3], %s220
          %s222 = smul.addr %s23, 8
          %s223 = scalar_lea.vmem %s0, %s222
          // Predicated region
          $region29: #{tpu_custom_call.1} parent=27 // pred_check
            _
          $region30: #{tpu_custom_call.1} parent=27 // pred_check_branch
            %225 = sbr.rel (0) target = $region32
          $region31: #{tpu_custom_call.1} parent=27 // pred_region
            // Predicated region
            $region33: #{tpu_custom_call.1} parent=31 // pred_check
              _
            $region34: #{tpu_custom_call.1} parent=31 // pred_check_branch
              %227 = sbr.rel (0) target = $region36
            $region35: #{tpu_custom_call.1} parent=31 // pred_region
              // Predicated region
              $region48: #{tpu_custom_call.1} parent=35 // pred_check
                _
              $region49: #{tpu_custom_call.1} parent=35 // pred_check_branch
                %248 = sbr.rel (0) target = $region51
              $region50: #{tpu_custom_call.1} parent=35 // pred_region
                loop: start=0, step=1, limit=1
                $region52: #{tpu_custom_call.1} parent=50 // loop_pre_header
                  _
                $region53: #{tpu_custom_call.1} parent=50 // loop_header
                  %s250 = sphi 0, %s254
                  %p251 = scmp.ge.s32.totalorder %s250, 1
                  %s255 = sphi %s223, %s223
                  %s256 = sphi %s221, %s221
                $region54: #{tpu_custom_call.1} parent=50 // loop_header_branch
                  %253 = sbr.rel (%p251) target = $region58
                $region55: #{tpu_custom_call.1} parent=50 // loop_body
                  %v257 = vld [vmem:[%s255] sm:$0xff]
                  %258 = vst [vmem:[%s256] sm:$0xff] %v257
                  %v259 = vld [vmem:[%s255 + $0x10] sm:$0xff]
                  %260 = vst [vmem:[%s256 + $0x8] sm:$0xff] %v259
                  %v261 = vld [vmem:[%s255 + $0x20] sm:$0xff]
                  %262 = vst [vmem:[%s256 + $0x10] sm:$0xff] %v261
                  %v263 = vld [vmem:[%s255 + $0x30] sm:$0xff]
                  %264 = vst [vmem:[%s256 + $0x18] sm:$0xff] %v263
                $region56: #{tpu_custom_call.1} parent=50 // loop_footer
                  %s254 = sadd.s32 1, %s250
                $region57: #{tpu_custom_call.1} parent=50 // loop_footer_branch
                  %249 = sbr.rel target = $region53
                $region58: #{tpu_custom_call.1} parent=50 // loop_exit
                  _
              $region51: #{tpu_custom_call.1} parent=35 // pred_fallthru
                _
              // Predicated region
              $region59: #{tpu_custom_call.1} parent=35 // pred_check
                _
              $region60: #{tpu_custom_call.1} parent=35 // pred_check_branch
                %266 = sbr.rel target = $region62
              $region61: #{tpu_custom_call.1} parent=35 // pred_region
                _
              $region62: #{tpu_custom_call.1} parent=35 // pred_fallthru
                _
            $region36: #{tpu_custom_call.1} parent=31 // pred_fallthru
              _
            // Predicated region
            $region37: #{tpu_custom_call.1} parent=31 // pred_check
              _
            $region38: #{tpu_custom_call.1} parent=31 // pred_check_branch
              %229 = sbr.rel target = $region40
            $region39: #{tpu_custom_call.1} parent=31 // pred_region
              loop: start=0, step=1, limit=1
              $region41: #{tpu_custom_call.1} parent=39 // loop_pre_header
                _
              $region42: #{tpu_custom_call.1} parent=39 // loop_header
                %s232 = sphi 0, %s236
                %p233 = scmp.ge.s32.totalorder %s232, 1
                %s237 = sphi %s223, %s223
                %s238 = sphi %s221, %s221
              $region43: #{tpu_custom_call.1} parent=39 // loop_header_branch
                %235 = sbr.rel (%p233) target = $region47
              $region44: #{tpu_custom_call.1} parent=39 // loop_body
                %v239 = vld [vmem:[%s237] sm:$0xff]
                %240 = vst [vmem:[%s238] sm:$0xff] %v239
                %v241 = vld [vmem:[%s237 + $0x10] sm:$0xff]
                %242 = vst [vmem:[%s238 + $0x8] sm:$0xff] %v241
                %v243 = vld [vmem:[%s237 + $0x20] sm:$0xff]
                %244 = vst [vmem:[%s238 + $0x10] sm:$0xff] %v243
                %v245 = vld [vmem:[%s237 + $0x30] sm:$0xff]
                %246 = vst [vmem:[%s238 + $0x18] sm:$0xff] %v245
              $region45: #{tpu_custom_call.1} parent=39 // loop_footer
                %s236 = sadd.s32 1, %s232
              $region46: #{tpu_custom_call.1} parent=39 // loop_footer_branch
                %231 = sbr.rel target = $region42
              $region47: #{tpu_custom_call.1} parent=39 // loop_exit
                _
            $region40: #{tpu_custom_call.1} parent=31 // pred_fallthru
              _
          $region32: #{tpu_custom_call.1} parent=27 // pred_fallthru
            _
          %267 = vnop
        $region28: #{tpu_custom_call.1} parent=23 // pred_fallthru
          _
        // Predicated region
        $region63: #{tpu_custom_call.1} parent=23 // pred_check
          %p268 = pneg %p74
        $region64: #{tpu_custom_call.1} parent=23 // pred_check_branch
          %270 = sbr.rel (%p268) target = $region66
        $region65: #{tpu_custom_call.1} parent=23 // pred_region
          %p271 = scmp.lt.s32.totalorder %s24, 2
          %s272 = scalar_select %p271, %s24, 2
          %s273 = smul.addr %s272, 8
          %s274 = smul.addr %s273, 8
          %s275 = scalar_lea.vmem %s1, %s274
        $region66: #{tpu_custom_call.1} parent=23 // pred_fallthru
          _
        // Predicated region
        $region67: #{tpu_custom_call.1} parent=23 // pred_check
          %p276 = pneg %p100
        $region68: #{tpu_custom_call.1} parent=23 // pred_check_branch
          %278 = sbr.rel (%p276) target = $region70
        $region69: #{tpu_custom_call.1} parent=23 // pred_region
          %p279 = scmp.lt.s32.totalorder %s24, 2
          %s280 = scalar_select %p279, %s24, 2
          %s281 = smul.addr %s280, 8
          %s282 = smul.addr %s281, 8
          %s283 = scalar_lea.vmem %s2, %s282
        $region70: #{tpu_custom_call.1} parent=23 // pred_fallthru
          _
      $region24: #{tpu_custom_call.1} parent=5 // pred_fallthru
        _
      %p284 = scmp.le.s32.totalorder 1, %s16
      %p285 = scmp.lt.s32.totalorder %s16, 7
      %p286 = pnand %p284, %p285
      %p287 = pneg %p286
      // Predicated region
      $region71: #{tpu_custom_call.1} parent=5 // pred_check
        _
      $region72: #{tpu_custom_call.1} parent=5 // pred_check_branch
        %289 = sbr.rel (%p286) target = $region74
      $region73: #{tpu_custom_call.1} parent=5 // pred_region
        %s290 = ssub.s32 %s16, 1
        %s291 = sand.u32 %s41, 1
        %s292 = sand.u32 %s41, 1
        %s293 = smul.addr %s292, 32
        %s294 = scalar_lea.vmem [#allocation3], %s293
        // Predicated region
        $region75: #{tpu_custom_call.1} parent=73 // pred_check
          %p295 = pneg %p54
        $region76: #{tpu_custom_call.1} parent=73 // pred_check_branch
          %297 = sbr.rel (%p295) target = $region78
        $region77: #{tpu_custom_call.1} parent=73 // pred_region
          _
        $region78: #{tpu_custom_call.1} parent=73 // pred_fallthru
          _
        // Predicated region
        $region79: #{tpu_custom_call.1} parent=73 // pred_check
          %p298 = pneg %p127
        $region80: #{tpu_custom_call.1} parent=73 // pred_check_branch
          %300 = sbr.rel (%p298) target = $region82
        $region81: #{tpu_custom_call.1} parent=73 // pred_region
          %301 = dma.done [#allocation6], 64
        $region82: #{tpu_custom_call.1} parent=73 // pred_fallthru
          _
        // Predicated region
        $region83: #{tpu_custom_call.1} parent=73 // pred_check
          %p302 = pneg %p148
        $region84: #{tpu_custom_call.1} parent=73 // pred_check_branch
          %304 = sbr.rel (%p302) target = $region86
        $region85: #{tpu_custom_call.1} parent=73 // pred_region
          %305 = dma.done [#allocation8], 64
        $region86: #{tpu_custom_call.1} parent=73 // pred_fallthru
          _
        %306 = sfence
        %s307 = sand.u32 %s41, 1
        %s308 = sand.u32 %s41, 1
        %s309 = smul.addr %s308, 32
        %s310 = scalar_lea.vmem [#allocation3], %s309
        %p311 = pneg %p54
        %p312 = pneg %p51
        %p313 = scmp.lt.s32.totalorder %s26, 2
        %s314 = scalar_select %p313, %s26, 2
        %s315 = smul.addr %s314, 8
        %s316 = smul.addr %s315, 8
        %s317 = scalar_lea.vmem %s1, %s316
        %p318 = pneg %p80
        %p319 = pneg %p77
        %p320 = scmp.lt.s32.totalorder %s26, 2
        %s321 = scalar_select %p320, %s26, 2
        %s322 = smul.addr %s321, 8
        %s323 = smul.addr %s322, 8
        %s324 = scalar_lea.vmem %s2, %s323
        %p325 = pneg %p106
        %p326 = pneg %p103
        %p327 = pneg %p127
        %p328 = pneg %p124
        %p329 = pneg %p148
        %p330 = pneg %p145
        %p331 = pneg %p174
        %p332 = pneg %p171
        %s333 = sand.u32 %s161, 1
        %s334 = scalar_lea.sflag [#allocation5], %s333
        %s335 = sand.u32 %s161, 1
        %s336 = smul.addr %s335, 32
        %s337 = scalar_lea.vmem [#allocation9], %s336
        %p338 = scmp.lt.s32.totalorder %s26, 2
        %s339 = scalar_select %p338, %s26, 2
        %s340 = smul.addr %s339, 8
        %s341 = smul.addr %s340, 8
        %s342 = scalar_lea.vmem %s1, %s341
        %p343 = scmp.lt.s32.totalorder %s26, 2
        %s344 = scalar_select %p343, %s26, 2
        %s345 = smul.addr %s344, 8
        %s346 = smul.addr %s345, 8
        %s347 = scalar_lea.vmem %s2, %s346
        %p348 = scmp.eq.s32.totalorder %s26, 0
        // Predicated region
        $region87: #{tpu_custom_call.1} parent=73 // pred_check
          %p349 = pneg %p348
        $region88: #{tpu_custom_call.1} parent=73 // pred_check_branch
          %351 = sbr.rel (%p349) target = $region90
        $region89: #{tpu_custom_call.1} parent=73 // pred_region
          %v352 = vld [vmem:[%s294] sm:$0xff]
          %v353 = vld [vmem:[%s294 + $0x8] sm:$0xff]
          %v354 = vld [vmem:[%s294 + $0x10] sm:$0xff]
          %v355 = vld [vmem:[%s294 + $0x18] sm:$0xff]
          %356 = vst [vmem:[%s337] sm:$0xff] %v352
          %357 = vst [vmem:[%s337 + $0x8] sm:$0xff] %v353
          %358 = vst [vmem:[%s337 + $0x10] sm:$0xff] %v354
          %359 = vst [vmem:[%s337 + $0x18] sm:$0xff] %v355
          %360 = vst [vmem:[#allocation2] sm:$0xff] 0.0
          %361 = vst [vmem:[#allocation2 + $0x8] sm:$0xff] 0.0
          %362 = vst [vmem:[#allocation2 + $0x10] sm:$0xff] 0.0
          %363 = vst [vmem:[#allocation2 + $0x18] sm:$0xff] 0.0
        $region90: #{tpu_custom_call.1} parent=73 // pred_fallthru
          _
        %s364 = sld [smem:[#allocation4]]
        %s365 = sld [smem:[#allocation4 + $0x1]]
        %s366 = sld [smem:[#allocation4 + $0x2]]
        %s367 = sld [smem:[#allocation4 + $0x3]]
        %s368 = sld [smem:[#allocation4 + $0x80]]
        %s369 = sld [smem:[#allocation4 + $0x81]]
        %s370 = sld [smem:[#allocation4 + $0x82]]
        %s371 = sld [smem:[#allocation4 + $0x83]]
        %s372 = sld [smem:[#allocation4 + $0x100]]
        %s373 = sld [smem:[#allocation4 + $0x101]]
        %s374 = sld [smem:[#allocation4 + $0x102]]
        %s375 = sld [smem:[#allocation4 + $0x103]]
        %s376 = sld [smem:[#allocation4 + $0x180]]
        %s377 = sld [smem:[#allocation4 + $0x181]]
        %s378 = sld [smem:[#allocation4 + $0x182]]
        %s379 = sld [smem:[#allocation4 + $0x183]]
        %s380 = sld [smem:[#allocation7]]
        %s381 = sld [smem:[#allocation7 + $0x1]]
        %s382 = sld [smem:[#allocation7 + $0x2]]
        %s383 = sld [smem:[#allocation7 + $0x3]]
        %s384 = sld [smem:[#allocation7 + $0x80]]
        %s385 = sld [smem:[#allocation7 + $0x81]]
        %s386 = sld [smem:[#allocation7 + $0x82]]
        %s387 = sld [smem:[#allocation7 + $0x83]]
        %s388 = sld [smem:[#allocation7 + $0x100]]
        %s389 = sld [smem:[#allocation7 + $0x101]]
        %s390 = sld [smem:[#allocation7 + $0x102]]
        %s391 = sld [smem:[#allocation7 + $0x103]]
        %s392 = sld [smem:[#allocation7 + $0x180]]
        %s393 = sld [smem:[#allocation7 + $0x181]]
        %s394 = sld [smem:[#allocation7 + $0x182]]
        %s395 = sld [smem:[#allocation7 + $0x183]]
        %v396 = vld [vmem:[%s342] sm:$0xff]
        %v397 = vld [vmem:[%s342 + $0x8] sm:$0xff]
        %s398 = scalar_lea.vmem %s342, 16
        %v399 = vld [vmem:[%s398] sm:$0xff]
        %v400 = vld [vmem:[%s398 + $0x8] sm:$0xff]
        %s401 = scalar_lea.vmem %s342, 32
        %v402 = vld [vmem:[%s401] sm:$0xff]
        %v403 = vld [vmem:[%s401 + $0x8] sm:$0xff]
        %s404 = scalar_lea.vmem %s342, 48
        %v405 = vld [vmem:[%s404] sm:$0xff]
        %v406 = vld [vmem:[%s404 + $0x8] sm:$0xff]
        %v407 = vld [vmem:[%s347] sm:$0xff]
        %v408 = vld [vmem:[%s347 + $0x8] sm:$0xff]
        %s409 = scalar_lea.vmem %s347, 16
        %v410 = vld [vmem:[%s409] sm:$0xff]
        %v411 = vld [vmem:[%s409 + $0x8] sm:$0xff]
        %s412 = scalar_lea.vmem %s347, 32
        %v413 = vld [vmem:[%s412] sm:$0xff]
        %v414 = vld [vmem:[%s412 + $0x8] sm:$0xff]
        %s415 = scalar_lea.vmem %s347, 48
        %v416 = vld [vmem:[%s415] sm:$0xff]
        %v417 = vld [vmem:[%s415 + $0x8] sm:$0xff]
        %v418 = vld [vmem:[%s337] sm:$0xff]
        %s419 = scalar_lea.vmem %s337, 8 [#allocation9]
        %v420 = vld [vmem:[%s419] sm:$0xff]
        %s421 = scalar_lea.vmem %s337, 16 [#allocation9]
        %v422 = vld [vmem:[%s421] sm:$0xff]
        %s423 = scalar_lea.vmem %s337, 24 [#allocation9]
        %v424 = vld [vmem:[%s423] sm:$0xff]
        %vm425 = vcmask 64512
        %v427 = vsel %vm425, %v396, 0
        %v430 = vsel %vm425, %v397, 0
        %432 = vmatprep.subr.mxu0 0.0
        %433 = vmatpush1.msra.mxu0 %v418
        %434 = vmatprep.subr.mxu0 0.0
        %435 = vmatpush1.msra.mxu0 0.0
        %436 = vmatprep.subr.mxu0 0.0
        %437 = vmatpush1.msra.mxu0 0.0
        %438 = vmatprep.subr.mxu0 0.0
        %439 = vmatpush1.msra.mxu0 0.0
        %440 = vmatprep.subr.mxu0 0.0
        %441 = vmatpush1.msra.mxu0 0.0
        %442 = vmatprep.subr.mxu0 0.0
        %443 = vmatpush1.msra.mxu0 0.0
        %444 = vmatprep.subr.mxu0 0.0
        %445 = vmatpush1.msra.mxu0 0.0
        %446 = vmatprep.subr.mxu0 0.0
        %447 = vmatpush1.msra.mxu0 0.0
        %448 = vmatprep.subr.mxu0 0.0
        %449 = vmatpush1.msra.mxu0 0.0
        %450 = vmatprep.subr.mxu0 0.0
        %451 = vmatpush1.msra.mxu0 0.0
        %452 = vmatprep.subr.mxu0 0.0
        %453 = vmatpush1.msra.mxu0 0.0
        %454 = vmatprep.subr.mxu0 0.0
        %455 = vmatpush1.msra.mxu0 0.0
        %456 = vmatprep.subr.mxu0 0.0
        %457 = vmatpush1.msra.mxu0 0.0
        %458 = vmatprep.subr.mxu0 0.0
        %459 = vmatpush1.msra.mxu0 0.0
        %460 = vmatprep.subr.mxu0 0.0
        %461 = vmatpush1.msra.mxu0 0.0
        %462 = vmatprep.subr.mxu0 0.0
        %463 = vmatpush1.msra.mxu0 0.0
        %464 = vmatprep.subr.mxu0 0.0
        %465 = vmatpush1.msra.mxu0 0.0
        %466 = vmatprep.subr.mxu0 0.0
        %467 = vmatpush1.msra.mxu0 0.0
        %468 = vmatprep.subr.mxu0 0.0
        %469 = vmatpush1.msra.mxu0 0.0
        %470 = vmatprep.subr.mxu0 0.0
        %471 = vmatpush1.msra.mxu0 0.0
        %472 = vmatprep.subr.mxu0 0.0
        %473 = vmatpush1.msra.mxu0 0.0
        %474 = vmatprep.subr.mxu0 0.0
        %475 = vmatpush1.msra.mxu0 0.0
        %476 = vmatprep.subr.mxu0 0.0
        %477 = vmatpush1.msra.mxu0 0.0
        %478 = vmatprep.subr.mxu0 0.0
        %479 = vmatpush1.msra.mxu0 0.0
        %480 = vmatprep.subr.mxu0 0.0
        %481 = vmatpush1.msra.mxu0 0.0
        %482 = vmatprep.subr.mxu0 0.0
        %483 = vmatpush1.msra.mxu0 0.0
        %484 = vmatprep.subr.mxu0 0.0
        %485 = vmatpush1.msra.mxu0 0.0
        %486 = vmatprep.subr.mxu0 0.0
        %487 = vmatpush1.msra.mxu0 0.0
        %488 = vmatprep.subr.mxu0 0.0
        %489 = vmatpush1.msra.mxu0 0.0
        %490 = vmatprep.subr.mxu0 0.0
        %491 = vmatpush1.msra.mxu0 0.0
        %492 = vmatprep.subr.mxu0 0.0
        %493 = vmatpush1.msra.mxu0 0.0
        %494 = vmatprep.subr.mxu0 0.0
        %495 = vmatpush1.msra.mxu0 0.0
        %496 = vmatprep.mubr.f32.mxu0 0.0
        %497 = vmatmul.mubr.f32.gmra.mrb[0].mxu0 %v427
        %v498 = vpop.f32.mrb[0].mxu0
        %v499 = vadd.f32 0.0, %v498
        %v500 = vpop.f32.mrb[0].mxu0
        %501 = vmatprep.mubr.f32.mxu0 0.0
        %502 = vmatmul.mubr.f32.gmra.mrb[0].mxu0 %v430
        %v503 = vpop.f32.mrb[0].mxu0
        %v504 = vadd.f32 0.0, %v503
        %v505 = vpop.f32.mrb[0].mxu0
        %506 = vdwg.mxu0
        %v508 = vsel %vm425, %v399, 0
        %v511 = vsel %vm425, %v400, 0
        %513 = vmatprep.subr.mxu0 0.0
        %514 = vmatpush1.msra.mxu0 %v420
        %515 = vmatprep.subr.mxu0 0.0
        %516 = vmatpush1.msra.mxu0 0.0
        %517 = vmatprep.subr.mxu0 0.0
        %518 = vmatpush1.msra.mxu0 0.0
        %519 = vmatprep.subr.mxu0 0.0
        %520 = vmatpush1.msra.mxu0 0.0
        %521 = vmatprep.subr.mxu0 0.0
        %522 = vmatpush1.msra.mxu0 0.0
        %523 = vmatprep.subr.mxu0 0.0
        %524 = vmatpush1.msra.mxu0 0.0
        %525 = vmatprep.subr.mxu0 0.0
        %526 = vmatpush1.msra.mxu0 0.0
        %527 = vmatprep.subr.mxu0 0.0
        %528 = vmatpush1.msra.mxu0 0.0
        %529 = vmatprep.subr.mxu0 0.0
        %530 = vmatpush1.msra.mxu0 0.0
        %531 = vmatprep.subr.mxu0 0.0
        %532 = vmatpush1.msra.mxu0 0.0
        %533 = vmatprep.subr.mxu0 0.0
        %534 = vmatpush1.msra.mxu0 0.0
        %535 = vmatprep.subr.mxu0 0.0
        %536 = vmatpush1.msra.mxu0 0.0
        %537 = vmatprep.subr.mxu0 0.0
        %538 = vmatpush1.msra.mxu0 0.0
        %539 = vmatprep.subr.mxu0 0.0
        %540 = vmatpush1.msra.mxu0 0.0
        %541 = vmatprep.subr.mxu0 0.0
        %542 = vmatpush1.msra.mxu0 0.0
        %543 = vmatprep.subr.mxu0 0.0
        %544 = vmatpush1.msra.mxu0 0.0
        %545 = vmatprep.subr.mxu0 0.0
        %546 = vmatpush1.msra.mxu0 0.0
        %547 = vmatprep.subr.mxu0 0.0
        %548 = vmatpush1.msra.mxu0 0.0
        %549 = vmatprep.subr.mxu0 0.0
        %550 = vmatpush1.msra.mxu0 0.0
        %551 = vmatprep.subr.mxu0 0.0
        %552 = vmatpush1.msra.mxu0 0.0
        %553 = vmatprep.subr.mxu0 0.0
        %554 = vmatpush1.msra.mxu0 0.0
        %555 = vmatprep.subr.mxu0 0.0
        %556 = vmatpush1.msra.mxu0 0.0
        %557 = vmatprep.subr.mxu0 0.0
        %558 = vmatpush1.msra.mxu0 0.0
        %559 = vmatprep.subr.mxu0 0.0
        %560 = vmatpush1.msra.mxu0 0.0
        %561 = vmatprep.subr.mxu0 0.0
        %562 = vmatpush1.msra.mxu0 0.0
        %563 = vmatprep.subr.mxu0 0.0
        %564 = vmatpush1.msra.mxu0 0.0
        %565 = vmatprep.subr.mxu0 0.0
        %566 = vmatpush1.msra.mxu0 0.0
        %567 = vmatprep.subr.mxu0 0.0
        %568 = vmatpush1.msra.mxu0 0.0
        %569 = vmatprep.subr.mxu0 0.0
        %570 = vmatpush1.msra.mxu0 0.0
        %571 = vmatprep.subr.mxu0 0.0
        %572 = vmatpush1.msra.mxu0 0.0
        %573 = vmatprep.subr.mxu0 0.0
        %574 = vmatpush1.msra.mxu0 0.0
        %575 = vmatprep.subr.mxu0 0.0
        %576 = vmatpush1.msra.mxu0 0.0
        %577 = vmatprep.mubr.f32.mxu0 0.0
        %578 = vmatmul.mubr.f32.gmra.mrb[0].mxu0 %v508
        %v579 = vpop.f32.mrb[0].mxu0
        %v580 = vadd.f32 0.0, %v579
        %v581 = vpop.f32.mrb[0].mxu0
        %582 = vmatprep.mubr.f32.mxu0 0.0
        %583 = vmatmul.mubr.f32.gmra.mrb[0].mxu0 %v511
        %v584 = vpop.f32.mrb[0].mxu0
        %v585 = vadd.f32 0.0, %v584
        %v586 = vpop.f32.mrb[0].mxu0
        %587 = vdwg.mxu0
        %v589 = vsel %vm425, %v402, 0
        %v592 = vsel %vm425, %v403, 0
        %594 = vmatprep.subr.mxu0 0.0
        %595 = vmatpush1.msra.mxu0 %v422
        %596 = vmatprep.subr.mxu0 0.0
        %597 = vmatpush1.msra.mxu0 0.0
        %598 = vmatprep.subr.mxu0 0.0
        %599 = vmatpush1.msra.mxu0 0.0
        %600 = vmatprep.subr.mxu0 0.0
        %601 = vmatpush1.msra.mxu0 0.0
        %602 = vmatprep.subr.mxu0 0.0
        %603 = vmatpush1.msra.mxu0 0.0
        %604 = vmatprep.subr.mxu0 0.0
        %605 = vmatpush1.msra.mxu0 0.0
        %606 = vmatprep.subr.mxu0 0.0
        %607 = vmatpush1.msra.mxu0 0.0
        %608 = vmatprep.subr.mxu0 0.0
        %609 = vmatpush1.msra.mxu0 0.0
        %610 = vmatprep.subr.mxu0 0.0
        %611 = vmatpush1.msra.mxu0 0.0
        %612 = vmatprep.subr.mxu0 0.0
        %613 = vmatpush1.msra.mxu0 0.0
        %614 = vmatprep.subr.mxu0 0.0
        %615 = vmatpush1.msra.mxu0 0.0
        %616 = vmatprep.subr.mxu0 0.0
        %617 = vmatpush1.msra.mxu0 0.0
        %618 = vmatprep.subr.mxu0 0.0
        %619 = vmatpush1.msra.mxu0 0.0
        %620 = vmatprep.subr.mxu0 0.0
        %621 = vmatpush1.msra.mxu0 0.0
        %622 = vmatprep.subr.mxu0 0.0
        %623 = vmatpush1.msra.mxu0 0.0
        %624 = vmatprep.subr.mxu0 0.0
        %625 = vmatpush1.msra.mxu0 0.0
        %626 = vmatprep.subr.mxu0 0.0
        %627 = vmatpush1.msra.mxu0 0.0
        %628 = vmatprep.subr.mxu0 0.0
        %629 = vmatpush1.msra.mxu0 0.0
        %630 = vmatprep.subr.mxu0 0.0
        %631 = vmatpush1.msra.mxu0 0.0
        %632 = vmatprep.subr.mxu0 0.0
        %633 = vmatpush1.msra.mxu0 0.0
        %634 = vmatprep.subr.mxu0 0.0
        %635 = vmatpush1.msra.mxu0 0.0
        %636 = vmatprep.subr.mxu0 0.0
        %637 = vmatpush1.msra.mxu0 0.0
        %638 = vmatprep.subr.mxu0 0.0
        %639 = vmatpush1.msra.mxu0 0.0
        %640 = vmatprep.subr.mxu0 0.0
        %641 = vmatpush1.msra.mxu0 0.0
        %642 = vmatprep.subr.mxu0 0.0
        %643 = vmatpush1.msra.mxu0 0.0
        %644 = vmatprep.subr.mxu0 0.0
        %645 = vmatpush1.msra.mxu0 0.0
        %646 = vmatprep.subr.mxu0 0.0
        %647 = vmatpush1.msra.mxu0 0.0
        %648 = vmatprep.subr.mxu0 0.0
        %649 = vmatpush1.msra.mxu0 0.0
        %650 = vmatprep.subr.mxu0 0.0
        %651 = vmatpush1.msra.mxu0 0.0
        %652 = vmatprep.subr.mxu0 0.0
        %653 = vmatpush1.msra.mxu0 0.0
        %654 = vmatprep.subr.mxu0 0.0
        %655 = vmatpush1.msra.mxu0 0.0
        %656 = vmatprep.subr.mxu0 0.0
        %657 = vmatpush1.msra.mxu0 0.0
        %658 = vmatprep.mubr.f32.mxu0 0.0
        %659 = vmatmul.mubr.f32.gmra.mrb[0].mxu0 %v589
        %v660 = vpop.f32.mrb[0].mxu0
        %v661 = vadd.f32 0.0, %v660
        %v662 = vpop.f32.mrb[0].mxu0
        %663 = vmatprep.mubr.f32.mxu0 0.0
        %664 = vmatmul.mubr.f32.gmra.mrb[0].mxu0 %v592
        %v665 = vpop.f32.mrb[0].mxu0
        %v666 = vadd.f32 0.0, %v665
        %v667 = vpop.f32.mrb[0].mxu0
        %668 = vdwg.mxu0
        %v670 = vsel %vm425, %v405, 0
        %v673 = vsel %vm425, %v406, 0
        %675 = vmatprep.subr.mxu0 0.0
        %676 = vmatpush1.msra.mxu0 %v424
        %677 = vmatprep.subr.mxu0 0.0
        %678 = vmatpush1.msra.mxu0 0.0
        %679 = vmatprep.subr.mxu0 0.0
        %680 = vmatpush1.msra.mxu0 0.0
        %681 = vmatprep.subr.mxu0 0.0
        %682 = vmatpush1.msra.mxu0 0.0
        %683 = vmatprep.subr.mxu0 0.0
        %684 = vmatpush1.msra.mxu0 0.0
        %685 = vmatprep.subr.mxu0 0.0
        %686 = vmatpush1.msra.mxu0 0.0
        %687 = vmatprep.subr.mxu0 0.0
        %688 = vmatpush1.msra.mxu0 0.0
        %689 = vmatprep.subr.mxu0 0.0
        %690 = vmatpush1.msra.mxu0 0.0
        %691 = vmatprep.subr.mxu0 0.0
        %692 = vmatpush1.msra.mxu0 0.0
        %693 = vmatprep.subr.mxu0 0.0
        %694 = vmatpush1.msra.mxu0 0.0
        %695 = vmatprep.subr.mxu0 0.0
        %696 = vmatpush1.msra.mxu0 0.0
        %697 = vmatprep.subr.mxu0 0.0
        %698 = vmatpush1.msra.mxu0 0.0
        %699 = vmatprep.subr.mxu0 0.0
        %700 = vmatpush1.msra.mxu0 0.0
        %701 = vmatprep.subr.mxu0 0.0
        %702 = vmatpush1.msra.mxu0 0.0
        %703 = vmatprep.subr.mxu0 0.0
        %704 = vmatpush1.msra.mxu0 0.0
        %705 = vmatprep.subr.mxu0 0.0
        %706 = vmatpush1.msra.mxu0 0.0
        %707 = vmatprep.subr.mxu0 0.0
        %708 = vmatpush1.msra.mxu0 0.0
        %709 = vmatprep.subr.mxu0 0.0
        %710 = vmatpush1.msra.mxu0 0.0
        %711 = vmatprep.subr.mxu0 0.0
        %712 = vmatpush1.msra.mxu0 0.0
        %713 = vmatprep.subr.mxu0 0.0
        %714 = vmatpush1.msra.mxu0 0.0
        %715 = vmatprep.subr.mxu0 0.0
        %716 = vmatpush1.msra.mxu0 0.0
        %717 = vmatprep.subr.mxu0 0.0
        %718 = vmatpush1.msra.mxu0 0.0
        %719 = vmatprep.subr.mxu0 0.0
        %720 = vmatpush1.msra.mxu0 0.0
        %721 = vmatprep.subr.mxu0 0.0
        %722 = vmatpush1.msra.mxu0 0.0
        %723 = vmatprep.subr.mxu0 0.0
        %724 = vmatpush1.msra.mxu0 0.0
        %725 = vmatprep.subr.mxu0 0.0
        %726 = vmatpush1.msra.mxu0 0.0
        %727 = vmatprep.subr.mxu0 0.0
        %728 = vmatpush1.msra.mxu0 0.0
        %729 = vmatprep.subr.mxu0 0.0
        %730 = vmatpush1.msra.mxu0 0.0
        %731 = vmatprep.subr.mxu0 0.0
        %732 = vmatpush1.msra.mxu0 0.0
        %733 = vmatprep.subr.mxu0 0.0
        %734 = vmatpush1.msra.mxu0 0.0
        %735 = vmatprep.subr.mxu0 0.0
        %736 = vmatpush1.msra.mxu0 0.0
        %737 = vmatprep.subr.mxu0 0.0
        %738 = vmatpush1.msra.mxu0 0.0
        %739 = vmatprep.mubr.f32.mxu0 0.0
        %740 = vmatmul.mubr.f32.gmra.mrb[0].mxu0 %v670
        %v741 = vpop.f32.mrb[0].mxu0
        %v742 = vadd.f32 0.0, %v741
        %v743 = vpop.f32.mrb[0].mxu0
        %744 = vmatprep.mubr.f32.mxu0 0.0
        %745 = vmatmul.mubr.f32.gmra.mrb[0].mxu0 %v673
        %v746 = vpop.f32.mrb[0].mxu0
        %v747 = vadd.f32 0.0, %v746
        %v748 = vpop.f32.mrb[0].mxu0
        %749 = vdwg.mxu0
        %v750 = vstv %s364
        %v751 = vmul.f32 %v750, %v499
        %v752 = vmul.f32 %v750, %v504
        %v753 = vstv %s365
        %v754 = vmul.f32 %v753, %v580
        %v755 = vmul.f32 %v753, %v585
        %v756 = vadd.f32 %v751, %v754
        %v757 = vadd.f32 %v752, %v755
        %v758 = vstv %s366
        %v759 = vmul.f32 %v758, %v661
        %v760 = vmul.f32 %v758, %v666
        %v761 = vadd.f32 %v756, %v759
        %v762 = vadd.f32 %v757, %v760
        %v763 = vstv %s367
        %v764 = vmul.f32 %v763, %v742
        %v765 = vmul.f32 %v763, %v747
        %v766 = vadd.f32 %v761, %v764
        %v767 = vadd.f32 %v762, %v765
        %v768 = vstv %s368
        %v769 = vmul.f32 %v768, %v499
        %v770 = vmul.f32 %v768, %v504
        %v771 = vstv %s369
        %v772 = vmul.f32 %v771, %v580
        %v773 = vmul.f32 %v771, %v585
        %v774 = vadd.f32 %v769, %v772
        %v775 = vadd.f32 %v770, %v773
        %v776 = vstv %s370
        %v777 = vmul.f32 %v776, %v661
        %v778 = vmul.f32 %v776, %v666
        %v779 = vadd.f32 %v774, %v777
        %v780 = vadd.f32 %v775, %v778
        %v781 = vstv %s371
        %v782 = vmul.f32 %v781, %v742
        %v783 = vmul.f32 %v781, %v747
        %v784 = vadd.f32 %v779, %v782
        %v785 = vadd.f32 %v780, %v783
        %v786 = vstv %s372
        %v787 = vmul.f32 %v786, %v499
        %v788 = vmul.f32 %v786, %v504
        %v789 = vstv %s373
        %v790 = vmul.f32 %v789, %v580
        %v791 = vmul.f32 %v789, %v585
        %v792 = vadd.f32 %v787, %v790
        %v793 = vadd.f32 %v788, %v791
        %v794 = vstv %s374
        %v795 = vmul.f32 %v794, %v661
        %v796 = vmul.f32 %v794, %v666
        %v797 = vadd.f32 %v792, %v795
        %v798 = vadd.f32 %v793, %v796
        %v799 = vstv %s375
        %v800 = vmul.f32 %v799, %v742
        %v801 = vmul.f32 %v799, %v747
        %v802 = vadd.f32 %v797, %v800
        %v803 = vadd.f32 %v798, %v801
        %v804 = vstv %s376
        %v805 = vmul.f32 %v804, %v499
        %v806 = vmul.f32 %v804, %v504
        %v807 = vstv %s377
        %v808 = vmul.f32 %v807, %v580
        %v809 = vmul.f32 %v807, %v585
        %v810 = vadd.f32 %v805, %v808
        %v811 = vadd.f32 %v806, %v809
        %v812 = vstv %s378
        %v813 = vmul.f32 %v812, %v661
        %v814 = vmul.f32 %v812, %v666
        %v815 = vadd.f32 %v810, %v813
        %v816 = vadd.f32 %v811, %v814
        %v817 = vstv %s379
        %v818 = vmul.f32 %v817, %v742
        %v819 = vmul.f32 %v817, %v747
        %v820 = vadd.f32 %v815, %v818
        %v821 = vadd.f32 %v816, %v819
        %823 = vset.pattern.permute.xlu0 0
        %824 = vperm.xlu0 %823, %v407
        %v825 = vpop.permute.xlu0 %824
        %828 = vset.pattern.permute.xlu0 0
        %829 = vperm.xlu0 %828, %v408
        %v830 = vpop.permute.xlu0 %829
        %v832 = vadd.f32 %v766, %v825
        %v833 = vadd.f32 %v767, %v830
        %v834 = vtanh.pop %v832
        %v835 = vtanh.pop %v833
        %837 = vset.pattern.permute.xlu0 0
        %838 = vperm.xlu0 %837, %v410
        %v839 = vpop.permute.xlu0 %838
        %842 = vset.pattern.permute.xlu0 0
        %843 = vperm.xlu0 %842, %v411
        %v844 = vpop.permute.xlu0 %843
        %v846 = vadd.f32 %v784, %v839
        %v847 = vadd.f32 %v785, %v844
        %v848 = vtanh.pop %v846
        %v849 = vtanh.pop %v847
        %851 = vset.pattern.permute.xlu0 0
        %852 = vperm.xlu0 %851, %v413
        %v853 = vpop.permute.xlu0 %852
        %856 = vset.pattern.permute.xlu0 0
        %857 = vperm.xlu0 %856, %v414
        %v858 = vpop.permute.xlu0 %857
        %v860 = vadd.f32 %v802, %v853
        %v861 = vadd.f32 %v803, %v858
        %v862 = vtanh.pop %v860
        %v863 = vtanh.pop %v861
        %865 = vset.pattern.permute.xlu0 0
        %866 = vperm.xlu0 %865, %v416
        %v867 = vpop.permute.xlu0 %866
        %870 = vset.pattern.permute.xlu0 0
        %871 = vperm.xlu0 %870, %v417
        %v872 = vpop.permute.xlu0 %871
        %v874 = vadd.f32 %v820, %v867
        %v875 = vadd.f32 %v821, %v872
        %v876 = vtanh.pop %v874
        %v877 = vtanh.pop %v875
        %v878 = vstv %s380
        %v879 = vmul.f32 %v878, %v834
        %v880 = vmul.f32 %v878, %v835
        %v881 = vstv %s381
        %v882 = vmul.f32 %v881, %v848
        %v883 = vmul.f32 %v881, %v849
        %v884 = vadd.f32 %v879, %v882
        %v885 = vadd.f32 %v880, %v883
        %v886 = vstv %s382
        %v887 = vmul.f32 %v886, %v862
        %v888 = vmul.f32 %v886, %v863
        %v889 = vadd.f32 %v884, %v887
        %v890 = vadd.f32 %v885, %v888
        %v891 = vstv %s383
        %v892 = vmul.f32 %v891, %v876
        %v893 = vmul.f32 %v891, %v877
        %v894 = vadd.f32 %v889, %v892
        %v895 = vadd.f32 %v890, %v893
        %v896 = vstv %s384
        %v897 = vmul.f32 %v896, %v834
        %v898 = vmul.f32 %v896, %v835
        %v899 = vstv %s385
        %v900 = vmul.f32 %v899, %v848
        %v901 = vmul.f32 %v899, %v849
        %v902 = vadd.f32 %v897, %v900
        %v903 = vadd.f32 %v898, %v901
        %v904 = vstv %s386
        %v905 = vmul.f32 %v904, %v862
        %v906 = vmul.f32 %v904, %v863
        %v907 = vadd.f32 %v902, %v905
        %v908 = vadd.f32 %v903, %v906
        %v909 = vstv %s387
        %v910 = vmul.f32 %v909, %v876
        %v911 = vmul.f32 %v909, %v877
        %v912 = vadd.f32 %v907, %v910
        %v913 = vadd.f32 %v908, %v911
        %v914 = vstv %s388
        %v915 = vmul.f32 %v914, %v834
        %v916 = vmul.f32 %v914, %v835
        %v917 = vstv %s389
        %v918 = vmul.f32 %v917, %v848
        %v919 = vmul.f32 %v917, %v849
        %v920 = vadd.f32 %v915, %v918
        %v921 = vadd.f32 %v916, %v919
        %v922 = vstv %s390
        %v923 = vmul.f32 %v922, %v862
        %v924 = vmul.f32 %v922, %v863
        %v925 = vadd.f32 %v920, %v923
        %v926 = vadd.f32 %v921, %v924
        %v927 = vstv %s391
        %v928 = vmul.f32 %v927, %v876
        %v929 = vmul.f32 %v927, %v877
        %v930 = vadd.f32 %v925, %v928
        %v931 = vadd.f32 %v926, %v929
        %v932 = vstv %s392
        %v933 = vmul.f32 %v932, %v834
        %v934 = vmul.f32 %v932, %v835
        %v935 = vstv %s393
        %v936 = vmul.f32 %v935, %v848
        %v937 = vmul.f32 %v935, %v849
        %v938 = vadd.f32 %v933, %v936
        %v939 = vadd.f32 %v934, %v937
        %v940 = vstv %s394
        %v941 = vmul.f32 %v940, %v862
        %v942 = vmul.f32 %v940, %v863
        %v943 = vadd.f32 %v938, %v941
        %v944 = vadd.f32 %v939, %v942
        %v945 = vstv %s395
        %v946 = vmul.f32 %v945, %v876
        %v947 = vmul.f32 %v945, %v877
        %v948 = vadd.f32 %v943, %v946
        %v949 = vadd.f32 %v944, %v947
        %950 = vxpose.xlu0.b32.start [1/16] %v396, 128
        %951 = vxpose.xlu0.b32.cont [2/16] %v397, 128
        %952 = vxpose.xlu0.b32.cont [3/16] 0.0, 128
        %953 = vxpose.xlu0.b32.cont [4/16] 0.0, 128
        %954 = vxpose.xlu0.b32.cont [5/16] 0.0, 128
        %955 = vxpose.xlu0.b32.cont [6/16] 0.0, 128
        %956 = vxpose.xlu0.b32.cont [7/16] 0.0, 128
        %957 = vxpose.xlu0.b32.cont [8/16] 0.0, 128
        %958 = vxpose.xlu0.b32.cont [9/16] 0.0, 128
        %959 = vxpose.xlu0.b32.cont [10/16] 0.0, 128
        %960 = vxpose.xlu0.b32.cont [11/16] 0.0, 128
        %961 = vxpose.xlu0.b32.cont [12/16] 0.0, 128
        %962 = vxpose.xlu0.b32.cont [13/16] 0.0, 128
        %963 = vxpose.xlu0.b32.cont [14/16] 0.0, 128
        %964 = vxpose.xlu0.b32.cont [15/16] 0.0, 128
        %965 = vxpose.xlu0.b32.end [16/16] 0.0, 128
        %v966 = vpop.trf.xlu0
        %v967 = vpop.trf.xlu0
        %v968 = vpop.trf.xlu0
        %v969 = vpop.trf.xlu0
        %v970 = vpop.trf.xlu0
        %v971 = vpop.trf.xlu0
        %v972 = vpop.trf.xlu0
        %v973 = vpop.trf.xlu0
        %v974 = vpop.trf.xlu0
        %v975 = vpop.trf.xlu0
        %v976 = vpop.trf.xlu0
        %v977 = vpop.trf.xlu0
        %v978 = vpop.trf.xlu0
        %v979 = vpop.trf.xlu0
        %v980 = vpop.trf.xlu0
        %v981 = vpop.trf.xlu0
        %vm982 = vcmask 130048
        %v984 = vsel %vm982, %v966, 0
        %986 = vmatprep.subr.mxu0 0.0
        %987 = vmatpush1.msra.mxu0 %v894
        %988 = vmatprep.subr.mxu0 0.0
        %989 = vmatpush1.msra.mxu0 %v895
        %990 = vmatprep.subr.mxu0 0.0
        %991 = vmatpush1.msra.mxu0 0.0
        %992 = vmatprep.subr.mxu0 0.0
        %993 = vmatpush1.msra.mxu0 0.0
        %994 = vmatprep.subr.mxu0 0.0
        %995 = vmatpush1.msra.mxu0 0.0
        %996 = vmatprep.subr.mxu0 0.0
        %997 = vmatpush1.msra.mxu0 0.0
        %998 = vmatprep.subr.mxu0 0.0
        %999 = vmatpush1.msra.mxu0 0.0
        %1000 = vmatprep.subr.mxu0 0.0
        %1001 = vmatpush1.msra.mxu0 0.0
        %1002 = vmatprep.subr.mxu0 0.0
        %1003 = vmatpush1.msra.mxu0 0.0
        %1004 = vmatprep.subr.mxu0 0.0
        %1005 = vmatpush1.msra.mxu0 0.0
        %1006 = vmatprep.subr.mxu0 0.0
        %1007 = vmatpush1.msra.mxu0 0.0
        %1008 = vmatprep.subr.mxu0 0.0
        %1009 = vmatpush1.msra.mxu0 0.0
        %1010 = vmatprep.subr.mxu0 0.0
        %1011 = vmatpush1.msra.mxu0 0.0
        %1012 = vmatprep.subr.mxu0 0.0
        %1013 = vmatpush1.msra.mxu0 0.0
        %1014 = vmatprep.subr.mxu0 0.0
        %1015 = vmatpush1.msra.mxu0 0.0
        %1016 = vmatprep.subr.mxu0 0.0
        %1017 = vmatpush1.msra.mxu0 0.0
        %1018 = vmatprep.subr.mxu0 0.0
        %1019 = vmatpush1.msra.mxu0 0.0
        %1020 = vmatprep.subr.mxu0 0.0
        %1021 = vmatpush1.msra.mxu0 0.0
        %1022 = vmatprep.subr.mxu0 0.0
        %1023 = vmatpush1.msra.mxu0 0.0
        %1024 = vmatprep.subr.mxu0 0.0
        %1025 = vmatpush1.msra.mxu0 0.0
        %1026 = vmatprep.subr.mxu0 0.0
        %1027 = vmatpush1.msra.mxu0 0.0
        %1028 = vmatprep.subr.mxu0 0.0
        %1029 = vmatpush1.msra.mxu0 0.0
        %1030 = vmatprep.subr.mxu0 0.0
        %1031 = vmatpush1.msra.mxu0 0.0
        %1032 = vmatprep.subr.mxu0 0.0
        %1033 = vmatpush1.msra.mxu0 0.0
        %1034 = vmatprep.subr.mxu0 0.0
        %1035 = vmatpush1.msra.mxu0 0.0
        %1036 = vmatprep.subr.mxu0 0.0
        %1037 = vmatpush1.msra.mxu0 0.0
        %1038 = vmatprep.subr.mxu0 0.0
        %1039 = vmatpush1.msra.mxu0 0.0
        %1040 = vmatprep.subr.mxu0 0.0
        %1041 = vmatpush1.msra.mxu0 0.0
        %1042 = vmatprep.subr.mxu0 0.0
        %1043 = vmatpush1.msra.mxu0 0.0
        %1044 = vmatprep.subr.mxu0 0.0
        %1045 = vmatpush1.msra.mxu0 0.0
        %1046 = vmatprep.subr.mxu0 0.0
        %1047 = vmatpush1.msra.mxu0 0.0
        %1048 = vmatprep.subr.mxu0 0.0
        %1049 = vmatpush1.msra.mxu0 0.0
        %1050 = vmatprep.mubr.f32.mxu0 0.0
        %1051 = vmatmul.mubr.f32.gmra.mrb[0].mxu0 %v984
        %v1052 = vpop.f32.mrb[0].mxu0
        %v1053 = vadd.f32 0.0, %v1052
        %v1054 = vpop.f32.mrb[0].mxu0
        %1055 = vdwg.mxu0
        %1056 = vxpose.xlu0.b32.start [1/16] %v399, 128
        %1057 = vxpose.xlu0.b32.cont [2/16] %v400, 128
        %1058 = vxpose.xlu0.b32.cont [3/16] 0.0, 128
        %1059 = vxpose.xlu0.b32.cont [4/16] 0.0, 128
        %1060 = vxpose.xlu0.b32.cont [5/16] 0.0, 128
        %1061 = vxpose.xlu0.b32.cont [6/16] 0.0, 128
        %1062 = vxpose.xlu0.b32.cont [7/16] 0.0, 128
        %1063 = vxpose.xlu0.b32.cont [8/16] 0.0, 128
        %1064 = vxpose.xlu0.b32.cont [9/16] 0.0, 128
        %1065 = vxpose.xlu0.b32.cont [10/16] 0.0, 128
        %1066 = vxpose.xlu0.b32.cont [11/16] 0.0, 128
        %1067 = vxpose.xlu0.b32.cont [12/16] 0.0, 128
        %1068 = vxpose.xlu0.b32.cont [13/16] 0.0, 128
        %1069 = vxpose.xlu0.b32.cont [14/16] 0.0, 128
        %1070 = vxpose.xlu0.b32.cont [15/16] 0.0, 128
        %1071 = vxpose.xlu0.b32.end [16/16] 0.0, 128
        %v1072 = vpop.trf.xlu0
        %v1073 = vpop.trf.xlu0
        %v1074 = vpop.trf.xlu0
        %v1075 = vpop.trf.xlu0
        %v1076 = vpop.trf.xlu0
        %v1077 = vpop.trf.xlu0
        %v1078 = vpop.trf.xlu0
        %v1079 = vpop.trf.xlu0
        %v1080 = vpop.trf.xlu0
        %v1081 = vpop.trf.xlu0
        %v1082 = vpop.trf.xlu0
        %v1083 = vpop.trf.xlu0
        %v1084 = vpop.trf.xlu0
        %v1085 = vpop.trf.xlu0
        %v1086 = vpop.trf.xlu0
        %v1087 = vpop.trf.xlu0
        %v1089 = vsel %vm982, %v1072, 0
        %1091 = vmatprep.subr.mxu0 0.0
        %1092 = vmatpush1.msra.mxu0 %v912
        %1093 = vmatprep.subr.mxu0 0.0
        %1094 = vmatpush1.msra.mxu0 %v913
        %1095 = vmatprep.subr.mxu0 0.0
        %1096 = vmatpush1.msra.mxu0 0.0
        %1097 = vmatprep.subr.mxu0 0.0
        %1098 = vmatpush1.msra.mxu0 0.0
        %1099 = vmatprep.subr.mxu0 0.0
        %1100 = vmatpush1.msra.mxu0 0.0
        %1101 = vmatprep.subr.mxu0 0.0
        %1102 = vmatpush1.msra.mxu0 0.0
        %1103 = vmatprep.subr.mxu0 0.0
        %1104 = vmatpush1.msra.mxu0 0.0
        %1105 = vmatprep.subr.mxu0 0.0
        %1106 = vmatpush1.msra.mxu0 0.0
        %1107 = vmatprep.subr.mxu0 0.0
        %1108 = vmatpush1.msra.mxu0 0.0
        %1109 = vmatprep.subr.mxu0 0.0
        %1110 = vmatpush1.msra.mxu0 0.0
        %1111 = vmatprep.subr.mxu0 0.0
        %1112 = vmatpush1.msra.mxu0 0.0
        %1113 = vmatprep.subr.mxu0 0.0
        %1114 = vmatpush1.msra.mxu0 0.0
        %1115 = vmatprep.subr.mxu0 0.0
        %1116 = vmatpush1.msra.mxu0 0.0
        %1117 = vmatprep.subr.mxu0 0.0
        %1118 = vmatpush1.msra.mxu0 0.0
        %1119 = vmatprep.subr.mxu0 0.0
        %1120 = vmatpush1.msra.mxu0 0.0
        %1121 = vmatprep.subr.mxu0 0.0
        %1122 = vmatpush1.msra.mxu0 0.0
        %1123 = vmatprep.subr.mxu0 0.0
        %1124 = vmatpush1.msra.mxu0 0.0
        %1125 = vmatprep.subr.mxu0 0.0
        %1126 = vmatpush1.msra.mxu0 0.0
        %1127 = vmatprep.subr.mxu0 0.0
        %1128 = vmatpush1.msra.mxu0 0.0
        %1129 = vmatprep.subr.mxu0 0.0
        %1130 = vmatpush1.msra.mxu0 0.0
        %1131 = vmatprep.subr.mxu0 0.0
        %1132 = vmatpush1.msra.mxu0 0.0
        %1133 = vmatprep.subr.mxu0 0.0
        %1134 = vmatpush1.msra.mxu0 0.0
        %1135 = vmatprep.subr.mxu0 0.0
        %1136 = vmatpush1.msra.mxu0 0.0
        %1137 = vmatprep.subr.mxu0 0.0
        %1138 = vmatpush1.msra.mxu0 0.0
        %1139 = vmatprep.subr.mxu0 0.0
        %1140 = vmatpush1.msra.mxu0 0.0
        %1141 = vmatprep.subr.mxu0 0.0
        %1142 = vmatpush1.msra.mxu0 0.0
        %1143 = vmatprep.subr.mxu0 0.0
        %1144 = vmatpush1.msra.mxu0 0.0
        %1145 = vmatprep.subr.mxu0 0.0
        %1146 = vmatpush1.msra.mxu0 0.0
        %1147 = vmatprep.subr.mxu0 0.0
        %1148 = vmatpush1.msra.mxu0 0.0
        %1149 = vmatprep.subr.mxu0 0.0
        %1150 = vmatpush1.msra.mxu0 0.0
        %1151 = vmatprep.subr.mxu0 0.0
        %1152 = vmatpush1.msra.mxu0 0.0
        %1153 = vmatprep.subr.mxu0 0.0
        %1154 = vmatpush1.msra.mxu0 0.0
        %1155 = vmatprep.mubr.f32.mxu0 0.0
        %1156 = vmatmul.mubr.f32.gmra.mrb[0].mxu0 %v1089
        %v1157 = vpop.f32.mrb[0].mxu0
        %v1158 = vadd.f32 0.0, %v1157
        %v1159 = vpop.f32.mrb[0].mxu0
        %1160 = vdwg.mxu0
        %1161 = vxpose.xlu0.b32.start [1/16] %v402, 128
        %1162 = vxpose.xlu0.b32.cont [2/16] %v403, 128
        %1163 = vxpose.xlu0.b32.cont [3/16] 0.0, 128
        %1164 = vxpose.xlu0.b32.cont [4/16] 0.0, 128
        %1165 = vxpose.xlu0.b32.cont [5/16] 0.0, 128
        %1166 = vxpose.xlu0.b32.cont [6/16] 0.0, 128
        %1167 = vxpose.xlu0.b32.cont [7/16] 0.0, 128
        %1168 = vxpose.xlu0.b32.cont [8/16] 0.0, 128
        %1169 = vxpose.xlu0.b32.cont [9/16] 0.0, 128
        %1170 = vxpose.xlu0.b32.cont [10/16] 0.0, 128
        %1171 = vxpose.xlu0.b32.cont [11/16] 0.0, 128
        %1172 = vxpose.xlu0.b32.cont [12/16] 0.0, 128
        %1173 = vxpose.xlu0.b32.cont [13/16] 0.0, 128
        %1174 = vxpose.xlu0.b32.cont [14/16] 0.0, 128
        %1175 = vxpose.xlu0.b32.cont [15/16] 0.0, 128
        %1176 = vxpose.xlu0.b32.end [16/16] 0.0, 128
        %v1177 = vpop.trf.xlu0
        %v1178 = vpop.trf.xlu0
        %v1179 = vpop.trf.xlu0
        %v1180 = vpop.trf.xlu0
        %v1181 = vpop.trf.xlu0
        %v1182 = vpop.trf.xlu0
        %v1183 = vpop.trf.xlu0
        %v1184 = vpop.trf.xlu0
        %v1185 = vpop.trf.xlu0
        %v1186 = vpop.trf.xlu0
        %v1187 = vpop.trf.xlu0
        %v1188 = vpop.trf.xlu0
        %v1189 = vpop.trf.xlu0
        %v1190 = vpop.trf.xlu0
        %v1191 = vpop.trf.xlu0
        %v1192 = vpop.trf.xlu0
        %v1194 = vsel %vm982, %v1177, 0
        %1196 = vmatprep.subr.mxu0 0.0
        %1197 = vmatpush1.msra.mxu0 %v930
        %1198 = vmatprep.subr.mxu0 0.0
        %1199 = vmatpush1.msra.mxu0 %v931
        %1200 = vmatprep.subr.mxu0 0.0
        %1201 = vmatpush1.msra.mxu0 0.0
        %1202 = vmatprep.subr.mxu0 0.0
        %1203 = vmatpush1.msra.mxu0 0.0
        %1204 = vmatprep.subr.mxu0 0.0
        %1205 = vmatpush1.msra.mxu0 0.0
        %1206 = vmatprep.subr.mxu0 0.0
        %1207 = vmatpush1.msra.mxu0 0.0
        %1208 = vmatprep.subr.mxu0 0.0
        %1209 = vmatpush1.msra.mxu0 0.0
        %1210 = vmatprep.subr.mxu0 0.0
        %1211 = vmatpush1.msra.mxu0 0.0
        %1212 = vmatprep.subr.mxu0 0.0
        %1213 = vmatpush1.msra.mxu0 0.0
        %1214 = vmatprep.subr.mxu0 0.0
        %1215 = vmatpush1.msra.mxu0 0.0
        %1216 = vmatprep.subr.mxu0 0.0
        %1217 = vmatpush1.msra.mxu0 0.0
        %1218 = vmatprep.subr.mxu0 0.0
        %1219 = vmatpush1.msra.mxu0 0.0
        %1220 = vmatprep.subr.mxu0 0.0
        %1221 = vmatpush1.msra.mxu0 0.0
        %1222 = vmatprep.subr.mxu0 0.0
        %1223 = vmatpush1.msra.mxu0 0.0
        %1224 = vmatprep.subr.mxu0 0.0
        %1225 = vmatpush1.msra.mxu0 0.0
        %1226 = vmatprep.subr.mxu0 0.0
        %1227 = vmatpush1.msra.mxu0 0.0
        %1228 = vmatprep.subr.mxu0 0.0
        %1229 = vmatpush1.msra.mxu0 0.0
        %1230 = vmatprep.subr.mxu0 0.0
        %1231 = vmatpush1.msra.mxu0 0.0
        %1232 = vmatprep.subr.mxu0 0.0
        %1233 = vmatpush1.msra.mxu0 0.0
        %1234 = vmatprep.subr.mxu0 0.0
        %1235 = vmatpush1.msra.mxu0 0.0
        %1236 = vmatprep.subr.mxu0 0.0
        %1237 = vmatpush1.msra.mxu0 0.0
        %1238 = vmatprep.subr.mxu0 0.0
        %1239 = vmatpush1.msra.mxu0 0.0
        %1240 = vmatprep.subr.mxu0 0.0
        %1241 = vmatpush1.msra.mxu0 0.0
        %1242 = vmatprep.subr.mxu0 0.0
        %1243 = vmatpush1.msra.mxu0 0.0
        %1244 = vmatprep.subr.mxu0 0.0
        %1245 = vmatpush1.msra.mxu0 0.0
        %1246 = vmatprep.subr.mxu0 0.0
        %1247 = vmatpush1.msra.mxu0 0.0
        %1248 = vmatprep.subr.mxu0 0.0
        %1249 = vmatpush1.msra.mxu0 0.0
        %1250 = vmatprep.subr.mxu0 0.0
        %1251 = vmatpush1.msra.mxu0 0.0
        %1252 = vmatprep.subr.mxu0 0.0
        %1253 = vmatpush1.msra.mxu0 0.0
        %1254 = vmatprep.subr.mxu0 0.0
        %1255 = vmatpush1.msra.mxu0 0.0
        %1256 = vmatprep.subr.mxu0 0.0
        %1257 = vmatpush1.msra.mxu0 0.0
        %1258 = vmatprep.subr.mxu0 0.0
        %1259 = vmatpush1.msra.mxu0 0.0
        %1260 = vmatprep.mubr.f32.mxu0 0.0
        %1261 = vmatmul.mubr.f32.gmra.mrb[0].mxu0 %v1194
        %v1262 = vpop.f32.mrb[0].mxu0
        %v1263 = vadd.f32 0.0, %v1262
        %v1264 = vpop.f32.mrb[0].mxu0
        %1265 = vdwg.mxu0
        %1266 = vxpose.xlu0.b32.start [1/16] %v405, 128
        %1267 = vxpose.xlu0.b32.cont [2/16] %v406, 128
        %1268 = vxpose.xlu0.b32.cont [3/16] 0.0, 128
        %1269 = vxpose.xlu0.b32.cont [4/16] 0.0, 128
        %1270 = vxpose.xlu0.b32.cont [5/16] 0.0, 128
        %1271 = vxpose.xlu0.b32.cont [6/16] 0.0, 128
        %1272 = vxpose.xlu0.b32.cont [7/16] 0.0, 128
        %1273 = vxpose.xlu0.b32.cont [8/16] 0.0, 128
        %1274 = vxpose.xlu0.b32.cont [9/16] 0.0, 128
        %1275 = vxpose.xlu0.b32.cont [10/16] 0.0, 128
        %1276 = vxpose.xlu0.b32.cont [11/16] 0.0, 128
        %1277 = vxpose.xlu0.b32.cont [12/16] 0.0, 128
        %1278 = vxpose.xlu0.b32.cont [13/16] 0.0, 128
        %1279 = vxpose.xlu0.b32.cont [14/16] 0.0, 128
        %1280 = vxpose.xlu0.b32.cont [15/16] 0.0, 128
        %1281 = vxpose.xlu0.b32.end [16/16] 0.0, 128
        %v1282 = vpop.trf.xlu0
        %v1283 = vpop.trf.xlu0
        %v1284 = vpop.trf.xlu0
        %v1285 = vpop.trf.xlu0
        %v1286 = vpop.trf.xlu0
        %v1287 = vpop.trf.xlu0
        %v1288 = vpop.trf.xlu0
        %v1289 = vpop.trf.xlu0
        %v1290 = vpop.trf.xlu0
        %v1291 = vpop.trf.xlu0
        %v1292 = vpop.trf.xlu0
        %v1293 = vpop.trf.xlu0
        %v1294 = vpop.trf.xlu0
        %v1295 = vpop.trf.xlu0
        %v1296 = vpop.trf.xlu0
        %v1297 = vpop.trf.xlu0
        %v1299 = vsel %vm982, %v1282, 0
        %1301 = vmatprep.subr.mxu0 0.0
        %1302 = vmatpush1.msra.mxu0 %v948
        %1303 = vmatprep.subr.mxu0 0.0
        %1304 = vmatpush1.msra.mxu0 %v949
        %1305 = vmatprep.subr.mxu0 0.0
        %1306 = vmatpush1.msra.mxu0 0.0
        %1307 = vmatprep.subr.mxu0 0.0
        %1308 = vmatpush1.msra.mxu0 0.0
        %1309 = vmatprep.subr.mxu0 0.0
        %1310 = vmatpush1.msra.mxu0 0.0
        %1311 = vmatprep.subr.mxu0 0.0
        %1312 = vmatpush1.msra.mxu0 0.0
        %1313 = vmatprep.subr.mxu0 0.0
        %1314 = vmatpush1.msra.mxu0 0.0
        %1315 = vmatprep.subr.mxu0 0.0
        %1316 = vmatpush1.msra.mxu0 0.0
        %1317 = vmatprep.subr.mxu0 0.0
        %1318 = vmatpush1.msra.mxu0 0.0
        %1319 = vmatprep.subr.mxu0 0.0
        %1320 = vmatpush1.msra.mxu0 0.0
        %1321 = vmatprep.subr.mxu0 0.0
        %1322 = vmatpush1.msra.mxu0 0.0
        %1323 = vmatprep.subr.mxu0 0.0
        %1324 = vmatpush1.msra.mxu0 0.0
        %1325 = vmatprep.subr.mxu0 0.0
        %1326 = vmatpush1.msra.mxu0 0.0
        %1327 = vmatprep.subr.mxu0 0.0
        %1328 = vmatpush1.msra.mxu0 0.0
        %1329 = vmatprep.subr.mxu0 0.0
        %1330 = vmatpush1.msra.mxu0 0.0
        %1331 = vmatprep.subr.mxu0 0.0
        %1332 = vmatpush1.msra.mxu0 0.0
        %1333 = vmatprep.subr.mxu0 0.0
        %1334 = vmatpush1.msra.mxu0 0.0
        %1335 = vmatprep.subr.mxu0 0.0
        %1336 = vmatpush1.msra.mxu0 0.0
        %1337 = vmatprep.subr.mxu0 0.0
        %1338 = vmatpush1.msra.mxu0 0.0
        %1339 = vmatprep.subr.mxu0 0.0
        %1340 = vmatpush1.msra.mxu0 0.0
        %1341 = vmatprep.subr.mxu0 0.0
        %1342 = vmatpush1.msra.mxu0 0.0
        %1343 = vmatprep.subr.mxu0 0.0
        %1344 = vmatpush1.msra.mxu0 0.0
        %1345 = vmatprep.subr.mxu0 0.0
        %1346 = vmatpush1.msra.mxu0 0.0
        %1347 = vmatprep.subr.mxu0 0.0
        %1348 = vmatpush1.msra.mxu0 0.0
        %1349 = vmatprep.subr.mxu0 0.0
        %1350 = vmatpush1.msra.mxu0 0.0
        %1351 = vmatprep.subr.mxu0 0.0
        %1352 = vmatpush1.msra.mxu0 0.0
        %1353 = vmatprep.subr.mxu0 0.0
        %1354 = vmatpush1.msra.mxu0 0.0
        %1355 = vmatprep.subr.mxu0 0.0
        %1356 = vmatpush1.msra.mxu0 0.0
        %1357 = vmatprep.subr.mxu0 0.0
        %1358 = vmatpush1.msra.mxu0 0.0
        %1359 = vmatprep.subr.mxu0 0.0
        %1360 = vmatpush1.msra.mxu0 0.0
        %1361 = vmatprep.subr.mxu0 0.0
        %1362 = vmatpush1.msra.mxu0 0.0
        %1363 = vmatprep.subr.mxu0 0.0
        %1364 = vmatpush1.msra.mxu0 0.0
        %1365 = vmatprep.mubr.f32.mxu0 0.0
        %1366 = vmatmul.mubr.f32.gmra.mrb[0].mxu0 %v1299
        %v1367 = vpop.f32.mrb[0].mxu0
        %v1368 = vadd.f32 0.0, %v1367
        %v1369 = vpop.f32.mrb[0].mxu0
        %1370 = vdwg.mxu0
        %v1371 = vld [vmem:[#allocation2] sm:$0xff]
        %v1372 = vsub.f32 %v1371, %v1053
        %s1373 = scalar_lea.vmem [#allocation2], 8
        %v1374 = vld [vmem:[%s1373] sm:$0xff]
        %v1375 = vsub.f32 %v1374, %v1158
        %s1376 = scalar_lea.vmem [#allocation2], 16
        %v1377 = vld [vmem:[%s1376] sm:$0xff]
        %v1378 = vsub.f32 %v1377, %v1263
        %s1379 = scalar_lea.vmem [#allocation2], 24
        %v1380 = vld [vmem:[%s1379] sm:$0xff]
        %v1381 = vsub.f32 %v1380, %v1368
        %1382 = vst [vmem:[#allocation2] sm:$0xff] %v1372
        %1383 = vst [vmem:[%s1373] sm:$0xff] %v1375
        %1384 = vst [vmem:[%s1376] sm:$0xff] %v1378
        %1385 = vst [vmem:[%s1379] sm:$0xff] %v1381
        %1386 = vmatprep.subr.mxu0 0.0
        %1387 = vmatpush1.msra.mxu0 %v1372
        %1388 = vmatprep.subr.mxu0 0.0
        %1389 = vmatpush1.msra.mxu0 0.0
        %1390 = vmatprep.subr.mxu0 0.0
        %1391 = vmatpush1.msra.mxu0 0.0
        %1392 = vmatprep.subr.mxu0 0.0
        %1393 = vmatpush1.msra.mxu0 0.0
        %1394 = vmatprep.subr.mxu0 0.0
        %1395 = vmatpush1.msra.mxu0 0.0
        %1396 = vmatprep.subr.mxu0 0.0
        %1397 = vmatpush1.msra.mxu0 0.0
        %1398 = vmatprep.subr.mxu0 0.0
        %1399 = vmatpush1.msra.mxu0 0.0
        %1400 = vmatprep.subr.mxu0 0.0
        %1401 = vmatpush1.msra.mxu0 0.0
        %1402 = vmatprep.subr.mxu0 0.0
        %1403 = vmatpush1.msra.mxu0 0.0
        %1404 = vmatprep.subr.mxu0 0.0
        %1405 = vmatpush1.msra.mxu0 0.0
        %1406 = vmatprep.subr.mxu0 0.0
        %1407 = vmatpush1.msra.mxu0 0.0
        %1408 = vmatprep.subr.mxu0 0.0
        %1409 = vmatpush1.msra.mxu0 0.0
        %1410 = vmatprep.subr.mxu0 0.0
        %1411 = vmatpush1.msra.mxu0 0.0
        %1412 = vmatprep.subr.mxu0 0.0
        %1413 = vmatpush1.msra.mxu0 0.0
        %1414 = vmatprep.subr.mxu0 0.0
        %1415 = vmatpush1.msra.mxu0 0.0
        %1416 = vmatprep.subr.mxu0 0.0
        %1417 = vmatpush1.msra.mxu0 0.0
        %1418 = vmatprep.subr.mxu0 0.0
        %1419 = vmatpush1.msra.mxu0 0.0
        %1420 = vmatprep.subr.mxu0 0.0
        %1421 = vmatpush1.msra.mxu0 0.0
        %1422 = vmatprep.subr.mxu0 0.0
        %1423 = vmatpush1.msra.mxu0 0.0
        %1424 = vmatprep.subr.mxu0 0.0
        %1425 = vmatpush1.msra.mxu0 0.0
        %1426 = vmatprep.subr.mxu0 0.0
        %1427 = vmatpush1.msra.mxu0 0.0
        %1428 = vmatprep.subr.mxu0 0.0
        %1429 = vmatpush1.msra.mxu0 0.0
        %1430 = vmatprep.subr.mxu0 0.0
        %1431 = vmatpush1.msra.mxu0 0.0
        %1432 = vmatprep.subr.mxu0 0.0
        %1433 = vmatpush1.msra.mxu0 0.0
        %1434 = vmatprep.subr.mxu0 0.0
        %1435 = vmatpush1.msra.mxu0 0.0
        %1436 = vmatprep.subr.mxu0 0.0
        %1437 = vmatpush1.msra.mxu0 0.0
        %1438 = vmatprep.subr.mxu0 0.0
        %1439 = vmatpush1.msra.mxu0 0.0
        %1440 = vmatprep.subr.mxu0 0.0
        %1441 = vmatpush1.msra.mxu0 0.0
        %1442 = vmatprep.subr.mxu0 0.0
        %1443 = vmatpush1.msra.mxu0 0.0
        %1444 = vmatprep.subr.mxu0 0.0
        %1445 = vmatpush1.msra.mxu0 0.0
        %1446 = vmatprep.subr.mxu0 0.0
        %1447 = vmatpush1.msra.mxu0 0.0
        %1448 = vmatprep.subr.mxu0 0.0
        %1449 = vmatpush1.msra.mxu0 0.0
        %1450 = vmatprep.mubr.f32.mxu0 0.0
        %1451 = vmatmul.mubr.f32.gmra.mrb[0].mxu0 %v427
        %v1452 = vpop.f32.mrb[0].mxu0
        %v1453 = vadd.f32 0.0, %v1452
        %v1454 = vpop.f32.mrb[0].mxu0
        %1455 = vmatprep.mubr.f32.mxu0 0.0
        %1456 = vmatmul.mubr.f32.gmra.mrb[0].mxu0 %v430
        %v1457 = vpop.f32.mrb[0].mxu0
        %v1458 = vadd.f32 0.0, %v1457
        %v1459 = vpop.f32.mrb[0].mxu0
        %1460 = vdwg.mxu0
        %1461 = vmatprep.subr.mxu0 0.0
        %1462 = vmatpush1.msra.mxu0 %v1375
        %1463 = vmatprep.subr.mxu0 0.0
        %1464 = vmatpush1.msra.mxu0 0.0
        %1465 = vmatprep.subr.mxu0 0.0
        %1466 = vmatpush1.msra.mxu0 0.0
        %1467 = vmatprep.subr.mxu0 0.0
        %1468 = vmatpush1.msra.mxu0 0.0
        %1469 = vmatprep.subr.mxu0 0.0
        %1470 = vmatpush1.msra.mxu0 0.0
        %1471 = vmatprep.subr.mxu0 0.0
        %1472 = vmatpush1.msra.mxu0 0.0
        %1473 = vmatprep.subr.mxu0 0.0
        %1474 = vmatpush1.msra.mxu0 0.0
        %1475 = vmatprep.subr.mxu0 0.0
        %1476 = vmatpush1.msra.mxu0 0.0
        %1477 = vmatprep.subr.mxu0 0.0
        %1478 = vmatpush1.msra.mxu0 0.0
        %1479 = vmatprep.subr.mxu0 0.0
        %1480 = vmatpush1.msra.mxu0 0.0
        %1481 = vmatprep.subr.mxu0 0.0
        %1482 = vmatpush1.msra.mxu0 0.0
        %1483 = vmatprep.subr.mxu0 0.0
        %1484 = vmatpush1.msra.mxu0 0.0
        %1485 = vmatprep.subr.mxu0 0.0
        %1486 = vmatpush1.msra.mxu0 0.0
        %1487 = vmatprep.subr.mxu0 0.0
        %1488 = vmatpush1.msra.mxu0 0.0
        %1489 = vmatprep.subr.mxu0 0.0
        %1490 = vmatpush1.msra.mxu0 0.0
        %1491 = vmatprep.subr.mxu0 0.0
        %1492 = vmatpush1.msra.mxu0 0.0
        %1493 = vmatprep.subr.mxu0 0.0
        %1494 = vmatpush1.msra.mxu0 0.0
        %1495 = vmatprep.subr.mxu0 0.0
        %1496 = vmatpush1.msra.mxu0 0.0
        %1497 = vmatprep.subr.mxu0 0.0
        %1498 = vmatpush1.msra.mxu0 0.0
        %1499 = vmatprep.subr.mxu0 0.0
        %1500 = vmatpush1.msra.mxu0 0.0
        %1501 = vmatprep.subr.mxu0 0.0
        %1502 = vmatpush1.msra.mxu0 0.0
        %1503 = vmatprep.subr.mxu0 0.0
        %1504 = vmatpush1.msra.mxu0 0.0
        %1505 = vmatprep.subr.mxu0 0.0
        %1506 = vmatpush1.msra.mxu0 0.0
        %1507 = vmatprep.subr.mxu0 0.0
        %1508 = vmatpush1.msra.mxu0 0.0
        %1509 = vmatprep.subr.mxu0 0.0
        %1510 = vmatpush1.msra.mxu0 0.0
        %1511 = vmatprep.subr.mxu0 0.0
        %1512 = vmatpush1.msra.mxu0 0.0
        %1513 = vmatprep.subr.mxu0 0.0
        %1514 = vmatpush1.msra.mxu0 0.0
        %1515 = vmatprep.subr.mxu0 0.0
        %1516 = vmatpush1.msra.mxu0 0.0
        %1517 = vmatprep.subr.mxu0 0.0
        %1518 = vmatpush1.msra.mxu0 0.0
        %1519 = vmatprep.subr.mxu0 0.0
        %1520 = vmatpush1.msra.mxu0 0.0
        %1521 = vmatprep.subr.mxu0 0.0
        %1522 = vmatpush1.msra.mxu0 0.0
        %1523 = vmatprep.subr.mxu0 0.0
        %1524 = vmatpush1.msra.mxu0 0.0
        %1525 = vmatprep.mubr.f32.mxu0 0.0
        %1526 = vmatmul.mubr.f32.gmra.mrb[0].mxu0 %v508
        %v1527 = vpop.f32.mrb[0].mxu0
        %v1528 = vadd.f32 0.0, %v1527
        %v1529 = vpop.f32.mrb[0].mxu0
        %1530 = vmatprep.mubr.f32.mxu0 0.0
        %1531 = vmatmul.mubr.f32.gmra.mrb[0].mxu0 %v511
        %v1532 = vpop.f32.mrb[0].mxu0
        %v1533 = vadd.f32 0.0, %v1532
        %v1534 = vpop.f32.mrb[0].mxu0
        %1535 = vdwg.mxu0
        %1536 = vmatprep.subr.mxu0 0.0
        %1537 = vmatpush1.msra.mxu0 %v1378
        %1538 = vmatprep.subr.mxu0 0.0
        %1539 = vmatpush1.msra.mxu0 0.0
        %1540 = vmatprep.subr.mxu0 0.0
        %1541 = vmatpush1.msra.mxu0 0.0
        %1542 = vmatprep.subr.mxu0 0.0
        %1543 = vmatpush1.msra.mxu0 0.0
        %1544 = vmatprep.subr.mxu0 0.0
        %1545 = vmatpush1.msra.mxu0 0.0
        %1546 = vmatprep.subr.mxu0 0.0
        %1547 = vmatpush1.msra.mxu0 0.0
        %1548 = vmatprep.subr.mxu0 0.0
        %1549 = vmatpush1.msra.mxu0 0.0
        %1550 = vmatprep.subr.mxu0 0.0
        %1551 = vmatpush1.msra.mxu0 0.0
        %1552 = vmatprep.subr.mxu0 0.0
        %1553 = vmatpush1.msra.mxu0 0.0
        %1554 = vmatprep.subr.mxu0 0.0
        %1555 = vmatpush1.msra.mxu0 0.0
        %1556 = vmatprep.subr.mxu0 0.0
        %1557 = vmatpush1.msra.mxu0 0.0
        %1558 = vmatprep.subr.mxu0 0.0
        %1559 = vmatpush1.msra.mxu0 0.0
        %1560 = vmatprep.subr.mxu0 0.0
        %1561 = vmatpush1.msra.mxu0 0.0
        %1562 = vmatprep.subr.mxu0 0.0
        %1563 = vmatpush1.msra.mxu0 0.0
        %1564 = vmatprep.subr.mxu0 0.0
        %1565 = vmatpush1.msra.mxu0 0.0
        %1566 = vmatprep.subr.mxu0 0.0
        %1567 = vmatpush1.msra.mxu0 0.0
        %1568 = vmatprep.subr.mxu0 0.0
        %1569 = vmatpush1.msra.mxu0 0.0
        %1570 = vmatprep.subr.mxu0 0.0
        %1571 = vmatpush1.msra.mxu0 0.0
        %1572 = vmatprep.subr.mxu0 0.0
        %1573 = vmatpush1.msra.mxu0 0.0
        %1574 = vmatprep.subr.mxu0 0.0
        %1575 = vmatpush1.msra.mxu0 0.0
        %1576 = vmatprep.subr.mxu0 0.0
        %1577 = vmatpush1.msra.mxu0 0.0
        %1578 = vmatprep.subr.mxu0 0.0
        %1579 = vmatpush1.msra.mxu0 0.0
        %1580 = vmatprep.subr.mxu0 0.0
        %1581 = vmatpush1.msra.mxu0 0.0
        %1582 = vmatprep.subr.mxu0 0.0
        %1583 = vmatpush1.msra.mxu0 0.0
        %1584 = vmatprep.subr.mxu0 0.0
        %1585 = vmatpush1.msra.mxu0 0.0
        %1586 = vmatprep.subr.mxu0 0.0
        %1587 = vmatpush1.msra.mxu0 0.0
        %1588 = vmatprep.subr.mxu0 0.0
        %1589 = vmatpush1.msra.mxu0 0.0
        %1590 = vmatprep.subr.mxu0 0.0
        %1591 = vmatpush1.msra.mxu0 0.0
        %1592 = vmatprep.subr.mxu0 0.0
        %1593 = vmatpush1.msra.mxu0 0.0
        %1594 = vmatprep.subr.mxu0 0.0
        %1595 = vmatpush1.msra.mxu0 0.0
        %1596 = vmatprep.subr.mxu0 0.0
        %1597 = vmatpush1.msra.mxu0 0.0
        %1598 = vmatprep.subr.mxu0 0.0
        %1599 = vmatpush1.msra.mxu0 0.0
        %1600 = vmatprep.mubr.f32.mxu0 0.0
        %1601 = vmatmul.mubr.f32.gmra.mrb[0].mxu0 %v589
        %v1602 = vpop.f32.mrb[0].mxu0
        %v1603 = vadd.f32 0.0, %v1602
        %v1604 = vpop.f32.mrb[0].mxu0
        %1605 = vmatprep.mubr.f32.mxu0 0.0
        %1606 = vmatmul.mubr.f32.gmra.mrb[0].mxu0 %v592
        %v1607 = vpop.f32.mrb[0].mxu0
        %v1608 = vadd.f32 0.0, %v1607
        %v1609 = vpop.f32.mrb[0].mxu0
        %1610 = vdwg.mxu0
        %1611 = vmatprep.subr.mxu0 0.0
        %1612 = vmatpush1.msra.mxu0 %v1381
        %1613 = vmatprep.subr.mxu0 0.0
        %1614 = vmatpush1.msra.mxu0 0.0
        %1615 = vmatprep.subr.mxu0 0.0
        %1616 = vmatpush1.msra.mxu0 0.0
        %1617 = vmatprep.subr.mxu0 0.0
        %1618 = vmatpush1.msra.mxu0 0.0
        %1619 = vmatprep.subr.mxu0 0.0
        %1620 = vmatpush1.msra.mxu0 0.0
        %1621 = vmatprep.subr.mxu0 0.0
        %1622 = vmatpush1.msra.mxu0 0.0
        %1623 = vmatprep.subr.mxu0 0.0
        %1624 = vmatpush1.msra.mxu0 0.0
        %1625 = vmatprep.subr.mxu0 0.0
        %1626 = vmatpush1.msra.mxu0 0.0
        %1627 = vmatprep.subr.mxu0 0.0
        %1628 = vmatpush1.msra.mxu0 0.0
        %1629 = vmatprep.subr.mxu0 0.0
        %1630 = vmatpush1.msra.mxu0 0.0
        %1631 = vmatprep.subr.mxu0 0.0
        %1632 = vmatpush1.msra.mxu0 0.0
        %1633 = vmatprep.subr.mxu0 0.0
        %1634 = vmatpush1.msra.mxu0 0.0
        %1635 = vmatprep.subr.mxu0 0.0
        %1636 = vmatpush1.msra.mxu0 0.0
        %1637 = vmatprep.subr.mxu0 0.0
        %1638 = vmatpush1.msra.mxu0 0.0
        %1639 = vmatprep.subr.mxu0 0.0
        %1640 = vmatpush1.msra.mxu0 0.0
        %1641 = vmatprep.subr.mxu0 0.0
        %1642 = vmatpush1.msra.mxu0 0.0
        %1643 = vmatprep.subr.mxu0 0.0
        %1644 = vmatpush1.msra.mxu0 0.0
        %1645 = vmatprep.subr.mxu0 0.0
        %1646 = vmatpush1.msra.mxu0 0.0
        %1647 = vmatprep.subr.mxu0 0.0
        %1648 = vmatpush1.msra.mxu0 0.0
        %1649 = vmatprep.subr.mxu0 0.0
        %1650 = vmatpush1.msra.mxu0 0.0
        %1651 = vmatprep.subr.mxu0 0.0
        %1652 = vmatpush1.msra.mxu0 0.0
        %1653 = vmatprep.subr.mxu0 0.0
        %1654 = vmatpush1.msra.mxu0 0.0
        %1655 = vmatprep.subr.mxu0 0.0
        %1656 = vmatpush1.msra.mxu0 0.0
        %1657 = vmatprep.subr.mxu0 0.0
        %1658 = vmatpush1.msra.mxu0 0.0
        %1659 = vmatprep.subr.mxu0 0.0
        %1660 = vmatpush1.msra.mxu0 0.0
        %1661 = vmatprep.subr.mxu0 0.0
        %1662 = vmatpush1.msra.mxu0 0.0
        %1663 = vmatprep.subr.mxu0 0.0
        %1664 = vmatpush1.msra.mxu0 0.0
        %1665 = vmatprep.subr.mxu0 0.0
        %1666 = vmatpush1.msra.mxu0 0.0
        %1667 = vmatprep.subr.mxu0 0.0
        %1668 = vmatpush1.msra.mxu0 0.0
        %1669 = vmatprep.subr.mxu0 0.0
        %1670 = vmatpush1.msra.mxu0 0.0
        %1671 = vmatprep.subr.mxu0 0.0
        %1672 = vmatpush1.msra.mxu0 0.0
        %1673 = vmatprep.subr.mxu0 0.0
        %1674 = vmatpush1.msra.mxu0 0.0
        %1675 = vmatprep.mubr.f32.mxu0 0.0
        %1676 = vmatmul.mubr.f32.gmra.mrb[0].mxu0 %v670
        %v1677 = vpop.f32.mrb[0].mxu0
        %v1678 = vadd.f32 0.0, %v1677
        %v1679 = vpop.f32.mrb[0].mxu0
        %1680 = vmatprep.mubr.f32.mxu0 0.0
        %1681 = vmatmul.mubr.f32.gmra.mrb[0].mxu0 %v673
        %v1682 = vpop.f32.mrb[0].mxu0
        %v1683 = vadd.f32 0.0, %v1682
        %v1684 = vpop.f32.mrb[0].mxu0
        %1685 = vdwg.mxu0
        %v1686 = vmul.f32 %v750, %v1453
        %v1687 = vmul.f32 %v750, %v1458
        %v1688 = vmul.f32 %v753, %v1528
        %v1689 = vmul.f32 %v753, %v1533
        %v1690 = vadd.f32 %v1686, %v1688
        %v1691 = vadd.f32 %v1687, %v1689
        %v1692 = vmul.f32 %v758, %v1603
        %v1693 = vmul.f32 %v758, %v1608
        %v1694 = vadd.f32 %v1690, %v1692
        %v1695 = vadd.f32 %v1691, %v1693
        %v1696 = vmul.f32 %v763, %v1678
        %v1697 = vmul.f32 %v763, %v1683
        %v1698 = vadd.f32 %v1694, %v1696
        %v1699 = vadd.f32 %v1695, %v1697
        %v1700 = vmul.f32 %v768, %v1453
        %v1701 = vmul.f32 %v768, %v1458
        %v1702 = vmul.f32 %v771, %v1528
        %v1703 = vmul.f32 %v771, %v1533
        %v1704 = vadd.f32 %v1700, %v1702
        %v1705 = vadd.f32 %v1701, %v1703
        %v1706 = vmul.f32 %v776, %v1603
        %v1707 = vmul.f32 %v776, %v1608
        %v1708 = vadd.f32 %v1704, %v1706
        %v1709 = vadd.f32 %v1705, %v1707
        %v1710 = vmul.f32 %v781, %v1678
        %v1711 = vmul.f32 %v781, %v1683
        %v1712 = vadd.f32 %v1708, %v1710
        %v1713 = vadd.f32 %v1709, %v1711
        %v1714 = vmul.f32 %v786, %v1453
        %v1715 = vmul.f32 %v786, %v1458
        %v1716 = vmul.f32 %v789, %v1528
        %v1717 = vmul.f32 %v789, %v1533
        %v1718 = vadd.f32 %v1714, %v1716
        %v1719 = vadd.f32 %v1715, %v1717
        %v1720 = vmul.f32 %v794, %v1603
        %v1721 = vmul.f32 %v794, %v1608
        %v1722 = vadd.f32 %v1718, %v1720
        %v1723 = vadd.f32 %v1719, %v1721
        %v1724 = vmul.f32 %v799, %v1678
        %v1725 = vmul.f32 %v799, %v1683
        %v1726 = vadd.f32 %v1722, %v1724
        %v1727 = vadd.f32 %v1723, %v1725
        %v1728 = vmul.f32 %v804, %v1453
        %v1729 = vmul.f32 %v804, %v1458
        %v1730 = vmul.f32 %v807, %v1528
        %v1731 = vmul.f32 %v807, %v1533
        %v1732 = vadd.f32 %v1728, %v1730
        %v1733 = vadd.f32 %v1729, %v1731
        %v1734 = vmul.f32 %v812, %v1603
        %v1735 = vmul.f32 %v812, %v1608
        %v1736 = vadd.f32 %v1732, %v1734
        %v1737 = vadd.f32 %v1733, %v1735
        %v1738 = vmul.f32 %v817, %v1678
        %v1739 = vmul.f32 %v817, %v1683
        %v1740 = vadd.f32 %v1736, %v1738
        %v1741 = vadd.f32 %v1737, %v1739
        %v1742 = vadd.f32 %v1698, %v825
        %v1743 = vadd.f32 %v1699, %v830
        %v1744 = vtanh.pop %v1742
        %v1745 = vtanh.pop %v1743
        %v1746 = vadd.f32 %v1712, %v839
        %v1747 = vadd.f32 %v1713, %v844
        %v1748 = vtanh.pop %v1746
        %v1749 = vtanh.pop %v1747
        %v1750 = vadd.f32 %v1726, %v853
        %v1751 = vadd.f32 %v1727, %v858
        %v1752 = vtanh.pop %v1750
        %v1753 = vtanh.pop %v1751
        %v1754 = vadd.f32 %v1740, %v867
        %v1755 = vadd.f32 %v1741, %v872
        %v1756 = vtanh.pop %v1754
        %v1757 = vtanh.pop %v1755
        %v1758 = vmul.f32 %v878, %v1744
        %v1759 = vmul.f32 %v878, %v1745
        %v1760 = vmul.f32 %v881, %v1748
        %v1761 = vmul.f32 %v881, %v1749
        %v1762 = vadd.f32 %v1758, %v1760
        %v1763 = vadd.f32 %v1759, %v1761
        %v1764 = vmul.f32 %v886, %v1752
        %v1765 = vmul.f32 %v886, %v1753
        %v1766 = vadd.f32 %v1762, %v1764
        %v1767 = vadd.f32 %v1763, %v1765
        %v1768 = vmul.f32 %v891, %v1756
        %v1769 = vmul.f32 %v891, %v1757
        %v1770 = vadd.f32 %v1766, %v1768
        %v1771 = vadd.f32 %v1767, %v1769
        %v1772 = vmul.f32 %v896, %v1744
        %v1773 = vmul.f32 %v896, %v1745
        %v1774 = vmul.f32 %v899, %v1748
        %v1775 = vmul.f32 %v899, %v1749
        %v1776 = vadd.f32 %v1772, %v1774
        %v1777 = vadd.f32 %v1773, %v1775
        %v1778 = vmul.f32 %v904, %v1752
        %v1779 = vmul.f32 %v904, %v1753
        %v1780 = vadd.f32 %v1776, %v1778
        %v1781 = vadd.f32 %v1777, %v1779
        %v1782 = vmul.f32 %v909, %v1756
        %v1783 = vmul.f32 %v909, %v1757
        %v1784 = vadd.f32 %v1780, %v1782
        %v1785 = vadd.f32 %v1781, %v1783
        %v1786 = vmul.f32 %v914, %v1744
        %v1787 = vmul.f32 %v914, %v1745
        %v1788 = vmul.f32 %v917, %v1748
        %v1789 = vmul.f32 %v917, %v1749
        %v1790 = vadd.f32 %v1786, %v1788
        %v1791 = vadd.f32 %v1787, %v1789
        %v1792 = vmul.f32 %v922, %v1752
        %v1793 = vmul.f32 %v922, %v1753
        %v1794 = vadd.f32 %v1790, %v1792
        %v1795 = vadd.f32 %v1791, %v1793
        %v1796 = vmul.f32 %v927, %v1756
        %v1797 = vmul.f32 %v927, %v1757
        %v1798 = vadd.f32 %v1794, %v1796
        %v1799 = vadd.f32 %v1795, %v1797
        %v1800 = vmul.f32 %v932, %v1744
        %v1801 = vmul.f32 %v932, %v1745
        %v1802 = vmul.f32 %v935, %v1748
        %v1803 = vmul.f32 %v935, %v1749
        %v1804 = vadd.f32 %v1800, %v1802
        %v1805 = vadd.f32 %v1801, %v1803
        %v1806 = vmul.f32 %v940, %v1752
        %v1807 = vmul.f32 %v940, %v1753
        %v1808 = vadd.f32 %v1804, %v1806
        %v1809 = vadd.f32 %v1805, %v1807
        %v1810 = vmul.f32 %v945, %v1756
        %v1811 = vmul.f32 %v945, %v1757
        %v1812 = vadd.f32 %v1808, %v1810
        %v1813 = vadd.f32 %v1809, %v1811
        %1814 = vmatprep.subr.mxu0 0.0
        %1815 = vmatpush1.msra.mxu0 %v1770
        %1816 = vmatprep.subr.mxu0 0.0
        %1817 = vmatpush1.msra.mxu0 %v1771
        %1818 = vmatprep.subr.mxu0 0.0
        %1819 = vmatpush1.msra.mxu0 0.0
        %1820 = vmatprep.subr.mxu0 0.0
        %1821 = vmatpush1.msra.mxu0 0.0
        %1822 = vmatprep.subr.mxu0 0.0
        %1823 = vmatpush1.msra.mxu0 0.0
        %1824 = vmatprep.subr.mxu0 0.0
        %1825 = vmatpush1.msra.mxu0 0.0
        %1826 = vmatprep.subr.mxu0 0.0
        %1827 = vmatpush1.msra.mxu0 0.0
        %1828 = vmatprep.subr.mxu0 0.0
        %1829 = vmatpush1.msra.mxu0 0.0
        %1830 = vmatprep.subr.mxu0 0.0
        %1831 = vmatpush1.msra.mxu0 0.0
        %1832 = vmatprep.subr.mxu0 0.0
        %1833 = vmatpush1.msra.mxu0 0.0
        %1834 = vmatprep.subr.mxu0 0.0
        %1835 = vmatpush1.msra.mxu0 0.0
        %1836 = vmatprep.subr.mxu0 0.0
        %1837 = vmatpush1.msra.mxu0 0.0
        %1838 = vmatprep.subr.mxu0 0.0
        %1839 = vmatpush1.msra.mxu0 0.0
        %1840 = vmatprep.subr.mxu0 0.0
        %1841 = vmatpush1.msra.mxu0 0.0
        %1842 = vmatprep.subr.mxu0 0.0
        %1843 = vmatpush1.msra.mxu0 0.0
        %1844 = vmatprep.subr.mxu0 0.0
        %1845 = vmatpush1.msra.mxu0 0.0
        %1846 = vmatprep.subr.mxu0 0.0
        %1847 = vmatpush1.msra.mxu0 0.0
        %1848 = vmatprep.subr.mxu0 0.0
        %1849 = vmatpush1.msra.mxu0 0.0
        %1850 = vmatprep.subr.mxu0 0.0
        %1851 = vmatpush1.msra.mxu0 0.0
        %1852 = vmatprep.subr.mxu0 0.0
        %1853 = vmatpush1.msra.mxu0 0.0
        %1854 = vmatprep.subr.mxu0 0.0
        %1855 = vmatpush1.msra.mxu0 0.0
        %1856 = vmatprep.subr.mxu0 0.0
        %1857 = vmatpush1.msra.mxu0 0.0
        %1858 = vmatprep.subr.mxu0 0.0
        %1859 = vmatpush1.msra.mxu0 0.0
        %1860 = vmatprep.subr.mxu0 0.0
        %1861 = vmatpush1.msra.mxu0 0.0
        %1862 = vmatprep.subr.mxu0 0.0
        %1863 = vmatpush1.msra.mxu0 0.0
        %1864 = vmatprep.subr.mxu0 0.0
        %1865 = vmatpush1.msra.mxu0 0.0
        %1866 = vmatprep.subr.mxu0 0.0
        %1867 = vmatpush1.msra.mxu0 0.0
        %1868 = vmatprep.subr.mxu0 0.0
        %1869 = vmatpush1.msra.mxu0 0.0
        %1870 = vmatprep.subr.mxu0 0.0
        %1871 = vmatpush1.msra.mxu0 0.0
        %1872 = vmatprep.subr.mxu0 0.0
        %1873 = vmatpush1.msra.mxu0 0.0
        %1874 = vmatprep.subr.mxu0 0.0
        %1875 = vmatpush1.msra.mxu0 0.0
        %1876 = vmatprep.subr.mxu0 0.0
        %1877 = vmatpush1.msra.mxu0 0.0
        %1878 = vmatprep.mubr.f32.mxu0 0.0
        %1879 = vmatmul.mubr.f32.gmra.mrb[0].mxu0 %v984
        %v1880 = vpop.f32.mrb[0].mxu0
        %v1881 = vadd.f32 0.0, %v1880
        %v1882 = vpop.f32.mrb[0].mxu0
        %1883 = vdwg.mxu0
        %1884 = vmatprep.subr.mxu0 0.0
        %1885 = vmatpush1.msra.mxu0 %v1784
        %1886 = vmatprep.subr.mxu0 0.0
        %1887 = vmatpush1.msra.mxu0 %v1785
        %1888 = vmatprep.subr.mxu0 0.0
        %1889 = vmatpush1.msra.mxu0 0.0
        %1890 = vmatprep.subr.mxu0 0.0
        %1891 = vmatpush1.msra.mxu0 0.0
        %1892 = vmatprep.subr.mxu0 0.0
        %1893 = vmatpush1.msra.mxu0 0.0
        %1894 = vmatprep.subr.mxu0 0.0
        %1895 = vmatpush1.msra.mxu0 0.0
        %1896 = vmatprep.subr.mxu0 0.0
        %1897 = vmatpush1.msra.mxu0 0.0
        %1898 = vmatprep.subr.mxu0 0.0
        %1899 = vmatpush1.msra.mxu0 0.0
        %1900 = vmatprep.subr.mxu0 0.0
        %1901 = vmatpush1.msra.mxu0 0.0
        %1902 = vmatprep.subr.mxu0 0.0
        %1903 = vmatpush1.msra.mxu0 0.0
        %1904 = vmatprep.subr.mxu0 0.0
        %1905 = vmatpush1.msra.mxu0 0.0
        %1906 = vmatprep.subr.mxu0 0.0
        %1907 = vmatpush1.msra.mxu0 0.0
        %1908 = vmatprep.subr.mxu0 0.0
        %1909 = vmatpush1.msra.mxu0 0.0
        %1910 = vmatprep.subr.mxu0 0.0
        %1911 = vmatpush1.msra.mxu0 0.0
        %1912 = vmatprep.subr.mxu0 0.0
        %1913 = vmatpush1.msra.mxu0 0.0
        %1914 = vmatprep.subr.mxu0 0.0
        %1915 = vmatpush1.msra.mxu0 0.0
        %1916 = vmatprep.subr.mxu0 0.0
        %1917 = vmatpush1.msra.mxu0 0.0
        %1918 = vmatprep.subr.mxu0 0.0
        %1919 = vmatpush1.msra.mxu0 0.0
        %1920 = vmatprep.subr.mxu0 0.0
        %1921 = vmatpush1.msra.mxu0 0.0
        %1922 = vmatprep.subr.mxu0 0.0
        %1923 = vmatpush1.msra.mxu0 0.0
        %1924 = vmatprep.subr.mxu0 0.0
        %1925 = vmatpush1.msra.mxu0 0.0
        %1926 = vmatprep.subr.mxu0 0.0
        %1927 = vmatpush1.msra.mxu0 0.0
        %1928 = vmatprep.subr.mxu0 0.0
        %1929 = vmatpush1.msra.mxu0 0.0
        %1930 = vmatprep.subr.mxu0 0.0
        %1931 = vmatpush1.msra.mxu0 0.0
        %1932 = vmatprep.subr.mxu0 0.0
        %1933 = vmatpush1.msra.mxu0 0.0
        %1934 = vmatprep.subr.mxu0 0.0
        %1935 = vmatpush1.msra.mxu0 0.0
        %1936 = vmatprep.subr.mxu0 0.0
        %1937 = vmatpush1.msra.mxu0 0.0
        %1938 = vmatprep.subr.mxu0 0.0
        %1939 = vmatpush1.msra.mxu0 0.0
        %1940 = vmatprep.subr.mxu0 0.0
        %1941 = vmatpush1.msra.mxu0 0.0
        %1942 = vmatprep.subr.mxu0 0.0
        %1943 = vmatpush1.msra.mxu0 0.0
        %1944 = vmatprep.subr.mxu0 0.0
        %1945 = vmatpush1.msra.mxu0 0.0
        %1946 = vmatprep.subr.mxu0 0.0
        %1947 = vmatpush1.msra.mxu0 0.0
        %1948 = vmatprep.mubr.f32.mxu0 0.0
        %1949 = vmatmul.mubr.f32.gmra.mrb[0].mxu0 %v1089
        %v1950 = vpop.f32.mrb[0].mxu0
        %v1951 = vadd.f32 0.0, %v1950
        %v1952 = vpop.f32.mrb[0].mxu0
        %1953 = vdwg.mxu0
        %1954 = vmatprep.subr.mxu0 0.0
        %1955 = vmatpush1.msra.mxu0 %v1798
        %1956 = vmatprep.subr.mxu0 0.0
        %1957 = vmatpush1.msra.mxu0 %v1799
        %1958 = vmatprep.subr.mxu0 0.0
        %1959 = vmatpush1.msra.mxu0 0.0
        %1960 = vmatprep.subr.mxu0 0.0
        %1961 = vmatpush1.msra.mxu0 0.0
        %1962 = vmatprep.subr.mxu0 0.0
        %1963 = vmatpush1.msra.mxu0 0.0
        %1964 = vmatprep.subr.mxu0 0.0
        %1965 = vmatpush1.msra.mxu0 0.0
        %1966 = vmatprep.subr.mxu0 0.0
        %1967 = vmatpush1.msra.mxu0 0.0
        %1968 = vmatprep.subr.mxu0 0.0
        %1969 = vmatpush1.msra.mxu0 0.0
        %1970 = vmatprep.subr.mxu0 0.0
        %1971 = vmatpush1.msra.mxu0 0.0
        %1972 = vmatprep.subr.mxu0 0.0
        %1973 = vmatpush1.msra.mxu0 0.0
        %1974 = vmatprep.subr.mxu0 0.0
        %1975 = vmatpush1.msra.mxu0 0.0
        %1976 = vmatprep.subr.mxu0 0.0
        %1977 = vmatpush1.msra.mxu0 0.0
        %1978 = vmatprep.subr.mxu0 0.0
        %1979 = vmatpush1.msra.mxu0 0.0
        %1980 = vmatprep.subr.mxu0 0.0
        %1981 = vmatpush1.msra.mxu0 0.0
        %1982 = vmatprep.subr.mxu0 0.0
        %1983 = vmatpush1.msra.mxu0 0.0
        %1984 = vmatprep.subr.mxu0 0.0
        %1985 = vmatpush1.msra.mxu0 0.0
        %1986 = vmatprep.subr.mxu0 0.0
        %1987 = vmatpush1.msra.mxu0 0.0
        %1988 = vmatprep.subr.mxu0 0.0
        %1989 = vmatpush1.msra.mxu0 0.0
        %1990 = vmatprep.subr.mxu0 0.0
        %1991 = vmatpush1.msra.mxu0 0.0
        %1992 = vmatprep.subr.mxu0 0.0
        %1993 = vmatpush1.msra.mxu0 0.0
        %1994 = vmatprep.subr.mxu0 0.0
        %1995 = vmatpush1.msra.mxu0 0.0
        %1996 = vmatprep.subr.mxu0 0.0
        %1997 = vmatpush1.msra.mxu0 0.0
        %1998 = vmatprep.subr.mxu0 0.0
        %1999 = vmatpush1.msra.mxu0 0.0
        %2000 = vmatprep.subr.mxu0 0.0
        %2001 = vmatpush1.msra.mxu0 0.0
        %2002 = vmatprep.subr.mxu0 0.0
        %2003 = vmatpush1.msra.mxu0 0.0
        %2004 = vmatprep.subr.mxu0 0.0
        %2005 = vmatpush1.msra.mxu0 0.0
        %2006 = vmatprep.subr.mxu0 0.0
        %2007 = vmatpush1.msra.mxu0 0.0
        %2008 = vmatprep.subr.mxu0 0.0
        %2009 = vmatpush1.msra.mxu0 0.0
        %2010 = vmatprep.subr.mxu0 0.0
        %2011 = vmatpush1.msra.mxu0 0.0
        %2012 = vmatprep.subr.mxu0 0.0
        %2013 = vmatpush1.msra.mxu0 0.0
        %2014 = vmatprep.subr.mxu0 0.0
        %2015 = vmatpush1.msra.mxu0 0.0
        %2016 = vmatprep.subr.mxu0 0.0
        %2017 = vmatpush1.msra.mxu0 0.0
        %2018 = vmatprep.mubr.f32.mxu0 0.0
        %2019 = vmatmul.mubr.f32.gmra.mrb[0].mxu0 %v1194
        %v2020 = vpop.f32.mrb[0].mxu0
        %v2021 = vadd.f32 0.0, %v2020
        %v2022 = vpop.f32.mrb[0].mxu0
        %2023 = vdwg.mxu0
        %2024 = vmatprep.subr.mxu0 0.0
        %2025 = vmatpush1.msra.mxu0 %v1812
        %2026 = vmatprep.subr.mxu0 0.0
        %2027 = vmatpush1.msra.mxu0 %v1813
        %2028 = vmatprep.subr.mxu0 0.0
        %2029 = vmatpush1.msra.mxu0 0.0
        %2030 = vmatprep.subr.mxu0 0.0
        %2031 = vmatpush1.msra.mxu0 0.0
        %2032 = vmatprep.subr.mxu0 0.0
        %2033 = vmatpush1.msra.mxu0 0.0
        %2034 = vmatprep.subr.mxu0 0.0
        %2035 = vmatpush1.msra.mxu0 0.0
        %2036 = vmatprep.subr.mxu0 0.0
        %2037 = vmatpush1.msra.mxu0 0.0
        %2038 = vmatprep.subr.mxu0 0.0
        %2039 = vmatpush1.msra.mxu0 0.0
        %2040 = vmatprep.subr.mxu0 0.0
        %2041 = vmatpush1.msra.mxu0 0.0
        %2042 = vmatprep.subr.mxu0 0.0
        %2043 = vmatpush1.msra.mxu0 0.0
        %2044 = vmatprep.subr.mxu0 0.0
        %2045 = vmatpush1.msra.mxu0 0.0
        %2046 = vmatprep.subr.mxu0 0.0
        %2047 = vmatpush1.msra.mxu0 0.0
        %2048 = vmatprep.subr.mxu0 0.0
        %2049 = vmatpush1.msra.mxu0 0.0
        %2050 = vmatprep.subr.mxu0 0.0
        %2051 = vmatpush1.msra.mxu0 0.0
        %2052 = vmatprep.subr.mxu0 0.0
        %2053 = vmatpush1.msra.mxu0 0.0
        %2054 = vmatprep.subr.mxu0 0.0
        %2055 = vmatpush1.msra.mxu0 0.0
        %2056 = vmatprep.subr.mxu0 0.0
        %2057 = vmatpush1.msra.mxu0 0.0
        %2058 = vmatprep.subr.mxu0 0.0
        %2059 = vmatpush1.msra.mxu0 0.0
        %2060 = vmatprep.subr.mxu0 0.0
        %2061 = vmatpush1.msra.mxu0 0.0
        %2062 = vmatprep.subr.mxu0 0.0
        %2063 = vmatpush1.msra.mxu0 0.0
        %2064 = vmatprep.subr.mxu0 0.0
        %2065 = vmatpush1.msra.mxu0 0.0
        %2066 = vmatprep.subr.mxu0 0.0
        %2067 = vmatpush1.msra.mxu0 0.0
        %2068 = vmatprep.subr.mxu0 0.0
        %2069 = vmatpush1.msra.mxu0 0.0
        %2070 = vmatprep.subr.mxu0 0.0
        %2071 = vmatpush1.msra.mxu0 0.0
        %2072 = vmatprep.subr.mxu0 0.0
        %2073 = vmatpush1.msra.mxu0 0.0
        %2074 = vmatprep.subr.mxu0 0.0
        %2075 = vmatpush1.msra.mxu0 0.0
        %2076 = vmatprep.subr.mxu0 0.0
        %2077 = vmatpush1.msra.mxu0 0.0
        %2078 = vmatprep.subr.mxu0 0.0
        %2079 = vmatpush1.msra.mxu0 0.0
        %2080 = vmatprep.subr.mxu0 0.0
        %2081 = vmatpush1.msra.mxu0 0.0
        %2082 = vmatprep.subr.mxu0 0.0
        %2083 = vmatpush1.msra.mxu0 0.0
        %2084 = vmatprep.subr.mxu0 0.0
        %2085 = vmatpush1.msra.mxu0 0.0
        %2086 = vmatprep.subr.mxu0 0.0
        %2087 = vmatpush1.msra.mxu0 0.0
        %2088 = vmatprep.mubr.f32.mxu0 0.0
        %2089 = vmatmul.mubr.f32.gmra.mrb[0].mxu0 %v1299
        %v2090 = vpop.f32.mrb[0].mxu0
        %v2091 = vadd.f32 0.0, %v2090
        %v2092 = vpop.f32.mrb[0].mxu0
        %2093 = vdwg.mxu0
        %v2094 = vadd.f32 %v418, %v1881
        %2095 = vst [vmem:[%s337] sm:$0xff] %v2094
        %v2096 = vadd.f32 %v420, %v1951
        %2097 = vst [vmem:[%s419] sm:$0xff] %v2096
        %v2098 = vadd.f32 %v422, %v2021
        %2099 = vst [vmem:[%s421] sm:$0xff] %v2098
        %v2100 = vadd.f32 %v424, %v2091
        %2101 = vst [vmem:[%s423] sm:$0xff] %v2100
        %s2102 = sand.u32 %s161, 1
        %s2103 = scalar_lea.sflag [#allocation5], %s2102
        %s2104 = sand.u32 %s161, 1
        %s2105 = smul.addr %s2104, 32
        %s2106 = scalar_lea.vmem [#allocation9], %s2105
        // Predicated region
        $region91: #{tpu_custom_call.1} parent=73 // pred_check
          %p2107 = pneg %p171
        $region92: #{tpu_custom_call.1} parent=73 // pred_check_branch
          %2109 = sbr.rel (%p2107) target = $region94
        $region93: #{tpu_custom_call.1} parent=73 // pred_region
          %s2111 = ssub.s32 512, 512
          %2112 = vsyncadd %s2103, %s2111
          %s2113 = smul.addr %s25, 128
          %s2114 = scalar_lea.hbm %s5, %s2113
          %s2115 = sshll.u32 %s2106, 4
          %s2116 = int_to_ptr.vmem [resolvable:$true] %s2115
          %2121 = dma.vmem_to_hbm [thread:$0]  %s2116, 512, %s2114, %s2103, 128, 256, 8
        $region94: #{tpu_custom_call.1} parent=73 // pred_fallthru
          _
      $region74: #{tpu_custom_call.1} parent=5 // pred_fallthru
        _
      %p2122 = scmp.le.s32.totalorder 2, %s16
      // Predicated region
      $region95: #{tpu_custom_call.1} parent=5 // pred_check
        %p2123 = pneg %p2122
      $region96: #{tpu_custom_call.1} parent=5 // pred_check_branch
        %2125 = sbr.rel (%p2123) target = $region98
      $region97: #{tpu_custom_call.1} parent=5 // pred_region
        %s2126 = ssub.s32 %s16, 2
        // Predicated region
        $region99: #{tpu_custom_call.1} parent=97 // pred_check
          %p2127 = pneg %p177
        $region100: #{tpu_custom_call.1} parent=97 // pred_check_branch
          %2129 = sbr.rel (%p2127) target = $region102
        $region101: #{tpu_custom_call.1} parent=97 // pred_region
          %s2130 = sand.u32 %s162, 1
          %s2131 = scalar_lea.sflag [#allocation5], %s2130
          %s2132 = sand.u32 %s162, 1
          %s2133 = smul.addr %s2132, 32
          %s2134 = scalar_lea.vmem [#allocation9], %s2133
          %2135 = dma.done %s2131, 512
        $region102: #{tpu_custom_call.1} parent=97 // pred_fallthru
          _
      $region98: #{tpu_custom_call.1} parent=5 // pred_fallthru
        _
    $region6: #{tpu_custom_call.1} parent=1 // loop_footer
      %s20 = sadd.s32 1, %s16
    $region7: #{tpu_custom_call.1} parent=1 // loop_footer_branch
      %15 = sbr.rel target = $region3
    $region8: #{tpu_custom_call.1} parent=1 // loop_exit
      _
    %2136 = vsyncpa [#allocation5], 1
    %s2137 = scalar_lea.sflag [#allocation5], 1
    %2138 = vsyncpa %s2137, 1
    %2139 = vsyncpa [#allocation6], 1
    %s2140 = scalar_lea.sflag [#allocation6], 1
    %2141 = vsyncpa %s2140, 1
    %2142 = vsyncpa [#allocation8], 1

</llo_original>
